<compile_context>
chip_gen: v7x
topology: tpu7x:2x2x1
jax: 0.10.0
libtpu: 0.0.40
codegen_flags: <defaults>
</compile_context>

<pallas_src>
import functools

import jax
import jax.numpy as jnp
from jax.experimental import pallas as pl
from jax.experimental.pallas import tpu as pltpu

LANE = 128  # TPU lane width; the tiny fc2 output dim is padded up to this.


def _mlp_kernel(x_ref, w1_ref, b1_ref, w2_ref, b2_ref, o_ref):
    # x arrives as f32 straight from HBM; cast to bf16 on the VPU right before
    # the MXU push (free under DMA/MXU slack, halves nothing in HBM traffic).
    x_bf16 = x_ref[...].astype(jnp.bfloat16)
    # fc1: (tb, D)bf16 @ (D, H)bf16 -> f32 accumulator
    h = jnp.dot(x_bf16, w1_ref[...], preferred_element_type=jnp.float32)
    # bias + ReLU in f32 on the VPU
    h = jnp.maximum(h + b1_ref[...], 0.0)
    # fc2: downcast activations to bf16 for the MXU, accumulate in f32
    out = jnp.dot(h.astype(w2_ref.dtype), w2_ref[...],
                  preferred_element_type=jnp.float32)
    o_ref[...] = (out + b2_ref[...]).astype(o_ref.dtype)


@functools.partial(jax.jit, static_argnames=("tile_b",))
def wsi_classifier_forward(x, w1, b1, w2, b2, *, tile_b=512):
    """Pallas forward for WSI_classifier: fc2(relu(fc1(x)))."""
    B, D = x.shape
    H = w1.shape[1]
    O = w2.shape[1]
    out_dtype = jnp.float32

    # Lane-dense output: pad the tiny fc2 output dim (2) up to 128 (and no more).
    O_pad = pl.cdiv(O, LANE) * LANE

    # Pick an effective batch tile (shapes are static under jit, so plain Python):
    #  - keep >= 2 grid steps when the batch allows it (v7x: the "parallel" batch
    #    axis is what shards work across the 2 TensorCores),
    #  - never exceed the (sublane-rounded) batch,
    #  - stay a multiple of 8 for the (8, 128) block constraint.
    tb = max(8, int(tile_b) // 8 * 8)
    while tb > 128 and pl.cdiv(B, tb) < 2:
        tb //= 2
    tb = min(tb, max(8, ((B + 7) // 8) * 8))
    grid_b = pl.cdiv(B, tb)

    # Weights resident in bf16; biases stay f32 (added to the f32 accumulator).
    w1_b = w1.astype(jnp.bfloat16)
    w2_p = jnp.pad(w2, ((0, 0), (0, O_pad - O))).astype(jnp.bfloat16)
    b1_f = b1.astype(jnp.float32)
    b2_p = jnp.pad(b2.astype(jnp.float32), ((0, 0), (0, O_pad - O)))

    # Rough double-buffered VMEM footprint; only raise the scoped limit when a
    # big tile would collide with v5e's 16 MiB default (v6e/v7x default 32 MiB).
    est_vmem = (2 * (tb * D * 4 + tb * O_pad * 4)            # streamed x + out
                + 2 * ((D * H + H * O_pad) * 2               # resident weights
                       + (H + O_pad) * 4))                   # resident biases
    vmem_limit = None
    if est_vmem > 12 * 1024 * 1024:
        vmem_limit = min(est_vmem + (4 << 20), 48 << 20)

    cost = pl.CostEstimate(
        flops=2 * B * (D * H + H * O_pad),
        transcendentals=0,
        bytes_accessed=B * D * 4 + B * O_pad * 4
        + (D * H + H * O_pad) * 2 + (H + O_pad) * 4,
    )

    out = pl.pallas_call(
        _mlp_kernel,
        out_shape=jax.ShapeDtypeStruct((B, O_pad), out_dtype),
        grid_spec=pltpu.PrefetchScalarGridSpec(
            num_scalar_prefetch=0,
            grid=(grid_b,),
            in_specs=[
                pl.BlockSpec((tb, D), lambda i: (i, 0)),      # x tile (streamed f32)
                pl.BlockSpec((D, H), lambda i: (0, 0)),       # W1 (resident)
                pl.BlockSpec((1, H), lambda i: (0, 0)),       # b1 (resident)
                pl.BlockSpec((H, O_pad), lambda i: (0, 0)),   # W2 padded (resident)
                pl.BlockSpec((1, O_pad), lambda i: (0, 0)),   # b2 padded (resident)
            ],
            out_specs=pl.BlockSpec((tb, O_pad), lambda i: (i, 0)),
        ),
        compiler_params=pltpu.CompilerParams(
            dimension_semantics=("parallel",),  # batch axis shards across v7x cores
            vmem_limit_bytes=vmem_limit,
        ),
        cost_estimate=cost,
    )(x.astype(jnp.float32), w1_b, b1_f, w2_p, b2_p)

    # Strip the lane padding of the tiny fc2 output dim.
    return out[:, :O]


def init_params(key, input_dim=768, hidden_dim=256, output_dim=2,
                dtype=jnp.float32):
    """Deterministic init mimicking nn.Linear's U(-1/sqrt(fan_in), 1/sqrt(fan_in)).
    Weights are stored transposed: (in_features, out_features)."""
    k1, k2, k3, k4 = jax.random.split(key, 4)
    bound1 = 1.0 / (input_dim ** 0.5)
    bound2 = 1.0 / (hidden_dim ** 0.5)
    w1 = jax.random.uniform(k1, (input_dim, hidden_dim), dtype,
                            minval=-bound1, maxval=bound1)
    b1 = jax.random.uniform(k2, (1, hidden_dim), dtype,
                            minval=-bound1, maxval=bound1)
    w2 = jax.random.uniform(k3, (hidden_dim, output_dim), dtype,
                            minval=-bound2, maxval=bound2)
    b2 = jax.random.uniform(k4, (1, output_dim), dtype,
                            minval=-bound2, maxval=bound2)
    return w1, b1, w2, b2


if __name__ == "__main__":
    key = jax.random.PRNGKey(0)
    kx, kp = jax.random.split(key)

    input_dim, hidden_dim, output_dim = 768, 256, 2
    batch = 200  # not a multiple of the tile -> exercises the ragged-last-block path

    x = jax.random.normal(kx, (batch, input_dim), jnp.float32)
    w1, b1, w2, b2 = init_params(kp, input_dim, hidden_dim, output_dim)

    # Default tile_b=512 auto-downshifts to 128 here so grid_b=2 (both v7x TCs busy).
    out = wsi_classifier_forward(x, w1, b1, w2, b2)
    out = jax.block_until_ready(out)
    assert out.shape == (batch, output_dim)
    assert bool(jnp.all(jnp.isfinite(out)))

    # Pure-JAX reference using the same bf16 rounding of inputs/weights/activations
    # so the comparison isolates kernel correctness rather than cast error.
    xr = x.astype(jnp.bfloat16).astype(jnp.float32)
    w1r = w1.astype(jnp.bfloat16).astype(jnp.float32)
    w2r = w2.astype(jnp.bfloat16).astype(jnp.float32)
    h_ref = jnp.maximum(xr @ w1r + b1, 0.0)
    h_ref = h_ref.astype(jnp.bfloat16).astype(jnp.float32)
    ref = h_ref @ w2r + b2
    assert jnp.allclose(out, ref, atol=2e-3, rtol=2e-3), (
        float(jnp.max(jnp.abs(out - ref))))

    print("KERNEL_OK")
</pallas_src>

<mosaic_0001>
module attributes {stable_mosaic.version = 11 : i64} {
  func.func @_mlp_kernel(%arg0: i32, %arg1: memref<128x768xf32, #tpu.memory_space<vmem>>, %arg2: memref<768x256xbf16, #tpu.memory_space<vmem>>, %arg3: memref<1x256xf32, #tpu.memory_space<vmem>>, %arg4: memref<256x128xbf16, #tpu.memory_space<vmem>>, %arg5: memref<1x128xf32, #tpu.memory_space<vmem>>, %arg6: memref<128x128xf32, #tpu.memory_space<vmem>>) attributes {dimension_semantics = [#tpu.dimension_semantics<parallel>], iteration_bounds = array<i64: 2>, scalar_prefetch = 0 : i64, scratch_operands = 0 : i64, tpu.core_type = #tpu.core_type<tc>, window_params = [{transform_indices = @transform_0, window_bounds = array<i64: 128, 768>}, {pipeline_mode = #tpu.pipeline_mode<synchronous>, transform_indices = @transform_1, window_bounds = array<i64: 768, 256>}, {pipeline_mode = #tpu.pipeline_mode<synchronous>, transform_indices = @transform_2, window_bounds = array<i64: 1, 256>}, {pipeline_mode = #tpu.pipeline_mode<synchronous>, transform_indices = @transform_3, window_bounds = array<i64: 256, 128>}, {pipeline_mode = #tpu.pipeline_mode<synchronous>, transform_indices = @transform_4, window_bounds = array<i64: 1, 128>}, {transform_indices = @transform_5, window_bounds = array<i64: 128, 128>}]} {
    %c0 = arith.constant 0 : index
    %c0_0 = arith.constant 0 : index
    %0 = vector.load %arg1[%c0, %c0_0] : memref<128x768xf32, #tpu.memory_space<vmem>>, vector<128x768xf32>
    %1 = arith.truncf %0 : vector<128x768xf32> to vector<128x768xbf16>
    %c0_1 = arith.constant 0 : index
    %c0_2 = arith.constant 0 : index
    %2 = vector.load %arg2[%c0_1, %c0_2] : memref<768x256xbf16, #tpu.memory_space<vmem>>, vector<768x256xbf16>
    %cst = arith.constant dense<0.000000e+00> : vector<128x256xf32>
    %3 = tpu.matmul %1, %2, %cst {dimension_numbers = #tpu.dot_dimension_numbers<[1], [0], [0], [1], [0, 0, 1, 1], [], []>} : vector<128x768xbf16>, vector<768x256xbf16>, vector<128x256xf32> -> vector<128x256xf32>
    %c0_3 = arith.constant 0 : index
    %c0_4 = arith.constant 0 : index
    %4 = vector.load %arg3[%c0_3, %c0_4] : memref<1x256xf32, #tpu.memory_space<vmem>>, vector<1x256xf32>
    %5 = vector.broadcast %4 : vector<1x256xf32> to vector<128x256xf32>
    %6 = arith.addf %3, %5 : vector<128x256xf32>
    %cst_5 = arith.constant 0.000000e+00 : f32
    %7 = vector.broadcast %cst_5 : f32 to vector<128x256xf32>
    %8 = arith.maximumf %6, %7 : vector<128x256xf32>
    %9 = arith.truncf %8 : vector<128x256xf32> to vector<128x256xbf16>
    %c0_6 = arith.constant 0 : index
    %c0_7 = arith.constant 0 : index
    %10 = vector.load %arg4[%c0_6, %c0_7] : memref<256x128xbf16, #tpu.memory_space<vmem>>, vector<256x128xbf16>
    %cst_8 = arith.constant dense<0.000000e+00> : vector<128x128xf32>
    %11 = tpu.matmul %9, %10, %cst_8 {dimension_numbers = #tpu.dot_dimension_numbers<[1], [0], [0], [1], [0, 0, 1, 1], [], []>} : vector<128x256xbf16>, vector<256x128xbf16>, vector<128x128xf32> -> vector<128x128xf32>
    %c0_9 = arith.constant 0 : index
    %c0_10 = arith.constant 0 : index
    %12 = vector.load %arg5[%c0_9, %c0_10] : memref<1x128xf32, #tpu.memory_space<vmem>>, vector<1x128xf32>
    %13 = vector.broadcast %12 : vector<1x128xf32> to vector<128x128xf32>
    %14 = arith.addf %11, %13 : vector<128x128xf32>
    %c0_11 = arith.constant 0 : index
    %c0_12 = arith.constant 0 : index
    %15 = vector.load %arg6[%c0_11, %c0_12] : memref<128x128xf32, #tpu.memory_space<vmem>>, vector<128x128xf32>
    tpu.vector_store %arg6[%c0_11, %c0_12], %14 {strides = array<i32>} : memref<128x128xf32, #tpu.memory_space<vmem>>, vector<128x128xf32>,
    return
  }
  func.func @transform_0(%arg0: i32) -> (i32, i32) {
    %c0_i32 = arith.constant 0 : i32
    %c0_i32_0 = arith.constant 0 : i32
    return %arg0, %c0_i32 : i32, i32
  }
  func.func @transform_1(%arg0: i32) -> (i32, i32) {
    %c0_i32 = arith.constant 0 : i32
    %c0_i32_0 = arith.constant 0 : i32
    %c0_i32_1 = arith.constant 0 : i32
    return %c0_i32, %c0_i32_0 : i32, i32
  }
  func.func @transform_2(%arg0: i32) -> (i32, i32) {
    %c0_i32 = arith.constant 0 : i32
    %c0_i32_0 = arith.constant 0 : i32
    %c0_i32_1 = arith.constant 0 : i32
    return %c0_i32, %c0_i32_0 : i32, i32
  }
  func.func @transform_3(%arg0: i32) -> (i32, i32) {
    %c0_i32 = arith.constant 0 : i32
    %c0_i32_0 = arith.constant 0 : i32
    %c0_i32_1 = arith.constant 0 : i32
    return %c0_i32, %c0_i32_0 : i32, i32
  }
  func.func @transform_4(%arg0: i32) -> (i32, i32) {
    %c0_i32 = arith.constant 0 : i32
    %c0_i32_0 = arith.constant 0 : i32
    %c0_i32_1 = arith.constant 0 : i32
    return %c0_i32, %c0_i32_0 : i32, i32
  }
  func.func @transform_5(%arg0: i32) -> (i32, i32) {
    %c0_i32 = arith.constant 0 : i32
    %c0_i32_0 = arith.constant 0 : i32
    return %arg0, %c0_i32 : i32, i32
  }
}

</mosaic_0001>

<llo_original>
// kernel: wsi_classifier_forward.1
$region0: #{wsi_classifier_forward.1}
  #allocation0 [shape = 'u32[]', space=smem, size = 0x4, offset = 0x4, fixed_abs, tag = 'smem constant byte address 0x4 - core index']
  #allocation1 [shape = 'u32[144,128]{1,0:T(1,128)}', space=vmem, size = 0x12000, scoped, tag = 'internal scratch']
  %s0 = inlined_call_operand.vmem [shape: f32[200,768], index: 0, kind: input, shape index: {}]
  %s1 = inlined_call_operand.vmem [shape: bf16[768,256], index: 1, kind: input, shape index: {}]
  %s2 = inlined_call_operand.vmem [shape: f32[1,256], index: 2, kind: input, shape index: {}]
  %s3 = inlined_call_operand.vmem [shape: bf16[256,128], index: 3, kind: input, shape index: {}]
  %s4 = inlined_call_operand.vmem [shape: f32[1,128], index: 4, kind: input, shape index: {}]
  %s5 = inlined_call_operand.vmem [shape: f32[200,128], index: 5, kind: output, shape index: {}]
  %s6 = sld [smem:[#allocation0]]
  $region101: #{wsi_classifier_forward.1} parent=0
    _
  %s8 = ssub.s32 1, %s6
  %s9 = scalar_select 0, %s8, %s6
  $region1: #{wsi_classifier_forward.1} parent=0
    #allocation2 [shape = 'u8[131072]{0}', space=vmem, size = 0x20000, scoped, tag = 'output window, operand 0']
    loop: start=0, step=1, limit=4
    $region2: #{wsi_classifier_forward.1} parent=1 // loop_pre_header
      _
    $region3: #{wsi_classifier_forward.1} parent=1 // loop_header
      %s11 = sphi 0, %s15
      %p12 = scmp.ge.s32.totalorder %s11, 4
      %s21 = sphi 0, %s23
      %s24 = sphi 0, %s21
      %s25 = sphi 0, %s24
      %s41 = sphi 0, %s25
      %s45 = sphi 0, %s45
      %s47 = sphi 0, %s45
      %s48 = sphi 0, %s47
      %s62 = sphi 0, %s48
      %s66 = sphi 0, %s66
      %s68 = sphi 0, %s66
      %s69 = sphi 0, %s68
      %s83 = sphi 0, %s69
      %s87 = sphi 0, %s87
      %s89 = sphi 0, %s87
      %s90 = sphi 0, %s89
      %s104 = sphi 0, %s90
      %s108 = sphi 0, %s108
      %s110 = sphi 0, %s108
      %s111 = sphi 0, %s110
      %s125 = sphi 0, %s111
      %s131 = sphi 0, %s133
      %s134 = sphi 0, %s131
      %s135 = sphi 0, %s134
      %s151 = sphi 0, %s135
    $region4: #{wsi_classifier_forward.1} parent=1 // loop_header_branch
      %14 = sbr.rel (%p12) target = $region8
    $region5: #{wsi_classifier_forward.1} parent=1 // loop_body
      %s16 = ssub.s32 %s11, 1
      %s17 = ssub.s32 %s11, 2
      %s18 = sadd.s32 %s11, 1
      %s19 = ssub.s32 %s11, %s18
      %p20 = scmp.eq.s32.totalorder %s19, 0
      %s22 = sadd.s32 %s21, 1
      %s23 = scalar_select %p20, %s21, %s22
      %p26 = pneg %p20
      %p27 = scmp.eq.s32.totalorder %s11, 1
      %p28 = por %p26, %p27
      %p29 = scmp.ne.s32.totalorder %s21, %s24
      %p30 = scmp.eq.s32.totalorder %s11, 0
      %p31 = por %p29, %p30
      %p32 = scmp.ne.s32.totalorder %s21, %s24
      %p33 = scmp.eq.s32.totalorder %s16, 1
      %p34 = por %p32, %p33
      %p35 = scmp.ne.s32.totalorder %s24, %s25
      %p36 = scmp.eq.s32.totalorder %s16, 0
      %p37 = por %p35, %p36
      %p38 = scmp.ne.s32.totalorder %s24, %s25
      %p39 = scmp.eq.s32.totalorder %s17, 1
      %p40 = por %p38, %p39
      %p42 = scmp.ne.s32.totalorder %s25, %s41
      %p43 = scmp.eq.s32.totalorder %s17, 0
      %p44 = por %p42, %p43
      %s46 = sadd.s32 %s45, 1
      %p49 = scmp.eq.s32.totalorder %s11, 1
      %p50 = scmp.ne.s32.totalorder %s45, %s47
      %p51 = scmp.eq.s32.totalorder %s11, 0
      %p52 = por %p50, %p51
      %p53 = scmp.ne.s32.totalorder %s45, %s47
      %p54 = scmp.eq.s32.totalorder %s16, 1
      %p55 = por %p53, %p54
      %p56 = scmp.ne.s32.totalorder %s47, %s48
      %p57 = scmp.eq.s32.totalorder %s16, 0
      %p58 = por %p56, %p57
      %p59 = scmp.ne.s32.totalorder %s47, %s48
      %p60 = scmp.eq.s32.totalorder %s17, 1
      %p61 = por %p59, %p60
      %p63 = scmp.ne.s32.totalorder %s48, %s62
      %p64 = scmp.eq.s32.totalorder %s17, 0
      %p65 = por %p63, %p64
      %s67 = sadd.s32 %s66, 1
      %p70 = scmp.eq.s32.totalorder %s11, 1
      %p71 = scmp.ne.s32.totalorder %s66, %s68
      %p72 = scmp.eq.s32.totalorder %s11, 0
      %p73 = por %p71, %p72
      %p74 = scmp.ne.s32.totalorder %s66, %s68
      %p75 = scmp.eq.s32.totalorder %s16, 1
      %p76 = por %p74, %p75
      %p77 = scmp.ne.s32.totalorder %s68, %s69
      %p78 = scmp.eq.s32.totalorder %s16, 0
      %p79 = por %p77, %p78
      %p80 = scmp.ne.s32.totalorder %s68, %s69
      %p81 = scmp.eq.s32.totalorder %s17, 1
      %p82 = por %p80, %p81
      %p84 = scmp.ne.s32.totalorder %s69, %s83
      %p85 = scmp.eq.s32.totalorder %s17, 0
      %p86 = por %p84, %p85
      %s88 = sadd.s32 %s87, 1
      %p91 = scmp.eq.s32.totalorder %s11, 1
      %p92 = scmp.ne.s32.totalorder %s87, %s89
      %p93 = scmp.eq.s32.totalorder %s11, 0
      %p94 = por %p92, %p93
      %p95 = scmp.ne.s32.totalorder %s87, %s89
      %p96 = scmp.eq.s32.totalorder %s16, 1
      %p97 = por %p95, %p96
      %p98 = scmp.ne.s32.totalorder %s89, %s90
      %p99 = scmp.eq.s32.totalorder %s16, 0
      %p100 = por %p98, %p99
      %p101 = scmp.ne.s32.totalorder %s89, %s90
      %p102 = scmp.eq.s32.totalorder %s17, 1
      %p103 = por %p101, %p102
      %p105 = scmp.ne.s32.totalorder %s90, %s104
      %p106 = scmp.eq.s32.totalorder %s17, 0
      %p107 = por %p105, %p106
      %s109 = sadd.s32 %s108, 1
      %p112 = scmp.eq.s32.totalorder %s11, 1
      %p113 = scmp.ne.s32.totalorder %s108, %s110
      %p114 = scmp.eq.s32.totalorder %s11, 0
      %p115 = por %p113, %p114
      %p116 = scmp.ne.s32.totalorder %s108, %s110
      %p117 = scmp.eq.s32.totalorder %s16, 1
      %p118 = por %p116, %p117
      %p119 = scmp.ne.s32.totalorder %s110, %s111
      %p120 = scmp.eq.s32.totalorder %s16, 0
      %p121 = por %p119, %p120
      %p122 = scmp.ne.s32.totalorder %s110, %s111
      %p123 = scmp.eq.s32.totalorder %s17, 1
      %p124 = por %p122, %p123
      %p126 = scmp.ne.s32.totalorder %s111, %s125
      %p127 = scmp.eq.s32.totalorder %s17, 0
      %p128 = por %p126, %p127
      %s129 = ssub.s32 %s11, %s18
      %p130 = scmp.eq.s32.totalorder %s129, 0
      %s132 = sadd.s32 %s131, 1
      %s133 = scalar_select %p130, %s131, %s132
      %p136 = pneg %p130
      %p137 = scmp.eq.s32.totalorder %s11, 1
      %p138 = por %p136, %p137
      %p139 = scmp.ne.s32.totalorder %s131, %s134
      %p140 = scmp.eq.s32.totalorder %s11, 0
      %p141 = por %p139, %p140
      %p142 = scmp.ne.s32.totalorder %s131, %s134
      %p143 = scmp.eq.s32.totalorder %s16, 1
      %p144 = por %p142, %p143
      %p145 = scmp.ne.s32.totalorder %s134, %s135
      %p146 = scmp.eq.s32.totalorder %s16, 0
      %p147 = por %p145, %p146
      %p148 = scmp.ne.s32.totalorder %s134, %s135
      %p149 = scmp.eq.s32.totalorder %s17, 1
      %p150 = por %p148, %p149
      %p152 = scmp.ne.s32.totalorder %s135, %s151
      %p153 = scmp.eq.s32.totalorder %s17, 0
      %p154 = por %p152, %p153
      %p155 = scmp.le.s32.totalorder 1, %s11
      %p156 = scmp.lt.s32.totalorder %s11, 3
      %p157 = pnand %p155, %p156
      %p158 = pneg %p157
      // Predicated region
      $region9: #{wsi_classifier_forward.1} parent=5 // pred_check
        _
      $region10: #{wsi_classifier_forward.1} parent=5 // pred_check_branch
        %160 = sbr.rel (%p157) target = $region12
      $region11: #{wsi_classifier_forward.1} parent=5 // pred_region
        %s161 = ssub.s32 %s11, 1
        // Predicated region
        $region13: #{wsi_classifier_forward.1} parent=11 // pred_check
          %p162 = pneg %p58
        $region14: #{wsi_classifier_forward.1} parent=11 // pred_check_branch
          %164 = sbr.rel (%p162) target = $region16
        $region15: #{wsi_classifier_forward.1} parent=11 // pred_region
          _
        $region16: #{wsi_classifier_forward.1} parent=11 // pred_fallthru
          _
        // Predicated region
        $region17: #{wsi_classifier_forward.1} parent=11 // pred_check
          %p165 = pneg %p79
        $region18: #{wsi_classifier_forward.1} parent=11 // pred_check_branch
          %167 = sbr.rel (%p165) target = $region20
        $region19: #{wsi_classifier_forward.1} parent=11 // pred_region
          _
        $region20: #{wsi_classifier_forward.1} parent=11 // pred_fallthru
          _
        // Predicated region
        $region21: #{wsi_classifier_forward.1} parent=11 // pred_check
          %p168 = pneg %p100
        $region22: #{wsi_classifier_forward.1} parent=11 // pred_check_branch
          %170 = sbr.rel (%p168) target = $region24
        $region23: #{wsi_classifier_forward.1} parent=11 // pred_region
          _
        $region24: #{wsi_classifier_forward.1} parent=11 // pred_fallthru
          _
        // Predicated region
        $region25: #{wsi_classifier_forward.1} parent=11 // pred_check
          %p171 = pneg %p121
        $region26: #{wsi_classifier_forward.1} parent=11 // pred_check_branch
          %173 = sbr.rel (%p171) target = $region28
        $region27: #{wsi_classifier_forward.1} parent=11 // pred_region
          _
        $region28: #{wsi_classifier_forward.1} parent=11 // pred_fallthru
          _
      $region12: #{wsi_classifier_forward.1} parent=5 // pred_fallthru
        _
      %p174 = scmp.lt.s32.totalorder %s11, 2
      // Predicated region
      $region29: #{wsi_classifier_forward.1} parent=5 // pred_check
        %p175 = pneg %p174
      $region30: #{wsi_classifier_forward.1} parent=5 // pred_check_branch
        %177 = sbr.rel (%p175) target = $region32
      $region31: #{wsi_classifier_forward.1} parent=5 // pred_region
        // Predicated region
        $region33: #{wsi_classifier_forward.1} parent=31 // pred_check
          %p178 = pneg %p31
        $region34: #{wsi_classifier_forward.1} parent=31 // pred_check_branch
          %180 = sbr.rel (%p178) target = $region36
        $region35: #{wsi_classifier_forward.1} parent=31 // pred_region
          %s181 = smul.u32 16, %s11
          %s182 = ssub.s32 25, %s181
          %p183 = scmp.lt.s32.totalorder %s182, 16
          %s184 = scalar_select %p183, %s182, 16
          %s185 = smul.u32 128, %s184
          %s186 = smul.u32 %s185, 6
          %p187 = scmp.lt.s32.totalorder %s181, 24
          %s188 = scalar_select %p187, %s181, 24
          %s189 = smul.addr %s188, 6
          %s190 = smul.addr %s189, 8
          %s191 = scalar_lea.vmem %s0, %s190
          %s192 = smul.u32 16, %s11
          %s193 = ssub.s32 25, %s192
          %p194 = scmp.lt.s32.totalorder %s193, 16
          %s195 = scalar_select %p194, %s193, 16
          %s196 = smul.u32 128, %s195
          %s197 = smul.u32 %s196, 6
        $region36: #{wsi_classifier_forward.1} parent=31 // pred_fallthru
          _
      $region32: #{wsi_classifier_forward.1} parent=5 // pred_fallthru
        _
      %p198 = scmp.le.s32.totalorder 1, %s11
      %p199 = scmp.lt.s32.totalorder %s11, 3
      %p200 = pnand %p198, %p199
      %p201 = pneg %p200
      // Predicated region
      $region37: #{wsi_classifier_forward.1} parent=5 // pred_check
        _
      $region38: #{wsi_classifier_forward.1} parent=5 // pred_check_branch
        %203 = sbr.rel (%p200) target = $region40
      $region39: #{wsi_classifier_forward.1} parent=5 // pred_region
        %s204 = ssub.s32 %s11, 1
        %s205 = smul.u32 16, %s16
        %s206 = ssub.s32 25, %s205
        %p207 = scmp.lt.s32.totalorder %s206, 16
        %s208 = scalar_select %p207, %s206, 16
        %s209 = smul.u32 128, %s208
        %s210 = smul.u32 %s209, 6
        %p211 = scmp.lt.s32.totalorder %s205, 24
        %s212 = scalar_select %p211, %s205, 24
        %s213 = smul.addr %s212, 6
        %s214 = smul.addr %s213, 8
        %s215 = scalar_lea.vmem %s0, %s214
        %p216 = pneg %p37
        %p217 = pneg %p34
        %p218 = pneg %p58
        %p219 = pneg %p55
        %p220 = pneg %p79
        %p221 = pneg %p76
        %p222 = pneg %p100
        %p223 = pneg %p97
        %p224 = pneg %p121
        %p225 = pneg %p118
        %p226 = pneg %p147
        %p227 = pneg %p144
        %s228 = sand.u32 %s134, 1
        %s229 = sand.u32 %s134, 1
        %s230 = smul.addr %s229, 128
        %s231 = scalar_lea.vmem [#allocation2], %s230
        %s232 = smul.u32 16, %s16
        %s233 = ssub.s32 25, %s232
        %p234 = scmp.lt.s32.totalorder %s233, 16
        %s235 = scalar_select %p234, %s233, 16
        %s236 = smul.u32 128, %s235
        %s237 = smul.u32 %s236, 6
        %p238 = scmp.lt.s32.totalorder %s232, 24
        %s239 = scalar_select %p238, %s232, 24
        %s240 = smul.addr %s239, 6
        %s241 = smul.addr %s240, 8
        %s242 = scalar_lea.vmem %s0, %s241
        %s243 = smul.u32 16, %s16
        %s244 = ssub.s32 25, %s243
        %p245 = scmp.lt.s32.totalorder %s244, 16
        %s246 = scalar_select %p245, %s244, 16
        %s247 = smul.u32 128, %s246
        %s248 = smul.u32 %s247, 6
        %s249 = smul.u32 16, %s16
        %s250 = ssub.s32 25, %s249
        %p251 = scmp.lt.s32.totalorder %s250, 16
        %s252 = scalar_select %p251, %s250, 16
        %s253 = smul.u32 128, %s252
        %v255 = vld [vmem:[%s242] sm:$0xff]
        %v256 = vld [vmem:[%s242 + $0x8] sm:$0xff]
        %v257 = vld [vmem:[%s242 + $0x10] sm:$0xff]
        %v258 = vld [vmem:[%s242 + $0x18] sm:$0xff]
        %v259 = vld [vmem:[%s242 + $0x20] sm:$0xff]
        %v260 = vld [vmem:[%s242 + $0x28] sm:$0xff]
        %v261 = vld [vmem:[%s242 + $0x30] sm:$0xff]
        %v262 = vld [vmem:[%s242 + $0x38] sm:$0xff]
        %v263 = vld [vmem:[%s242 + $0x40] sm:$0xff]
        %v264 = vld [vmem:[%s242 + $0x48] sm:$0xff]
        %v265 = vld [vmem:[%s242 + $0x50] sm:$0xff]
        %v266 = vld [vmem:[%s242 + $0x58] sm:$0xff]
        %v267 = vld [vmem:[%s242 + $0x60] sm:$0xff]
        %v268 = vld [vmem:[%s242 + $0x68] sm:$0xff]
        %v269 = vld [vmem:[%s242 + $0x70] sm:$0xff]
        %v270 = vld [vmem:[%s242 + $0x78] sm:$0xff]
        %v271 = vld [vmem:[%s242 + $0x80] sm:$0xff]
        %v272 = vld [vmem:[%s242 + $0x88] sm:$0xff]
        %v273 = vld [vmem:[%s242 + $0x90] sm:$0xff]
        %v274 = vld [vmem:[%s242 + $0x98] sm:$0xff]
        %v275 = vld [vmem:[%s242 + $0xa0] sm:$0xff]
        %v276 = vld [vmem:[%s242 + $0xa8] sm:$0xff]
        %v277 = vld [vmem:[%s242 + $0xb0] sm:$0xff]
        %v278 = vld [vmem:[%s242 + $0xb8] sm:$0xff]
        %v279 = vld [vmem:[%s242 + $0xc0] sm:$0xff]
        %v280 = vld [vmem:[%s242 + $0xc8] sm:$0xff]
        %v281 = vld [vmem:[%s242 + $0xd0] sm:$0xff]
        %v282 = vld [vmem:[%s242 + $0xd8] sm:$0xff]
        %v283 = vld [vmem:[%s242 + $0xe0] sm:$0xff]
        %v284 = vld [vmem:[%s242 + $0xe8] sm:$0xff]
        %v285 = vld [vmem:[%s242 + $0xf0] sm:$0xff]
        %v286 = vld [vmem:[%s242 + $0xf8] sm:$0xff]
        %v287 = vld [vmem:[%s242 + $0x100] sm:$0xff]
        %v288 = vld [vmem:[%s242 + $0x108] sm:$0xff]
        %v289 = vld [vmem:[%s242 + $0x110] sm:$0xff]
        %v290 = vld [vmem:[%s242 + $0x118] sm:$0xff]
        %v291 = vld [vmem:[%s242 + $0x120] sm:$0xff]
        %v292 = vld [vmem:[%s242 + $0x128] sm:$0xff]
        %v293 = vld [vmem:[%s242 + $0x130] sm:$0xff]
        %v294 = vld [vmem:[%s242 + $0x138] sm:$0xff]
        %v295 = vld [vmem:[%s242 + $0x140] sm:$0xff]
        %v296 = vld [vmem:[%s242 + $0x148] sm:$0xff]
        %v297 = vld [vmem:[%s242 + $0x150] sm:$0xff]
        %v298 = vld [vmem:[%s242 + $0x158] sm:$0xff]
        %v299 = vld [vmem:[%s242 + $0x160] sm:$0xff]
        %v300 = vld [vmem:[%s242 + $0x168] sm:$0xff]
        %v301 = vld [vmem:[%s242 + $0x170] sm:$0xff]
        %v302 = vld [vmem:[%s242 + $0x178] sm:$0xff]
        %v303 = vld [vmem:[%s242 + $0x180] sm:$0xff]
        %v304 = vld [vmem:[%s242 + $0x188] sm:$0xff]
        %v305 = vld [vmem:[%s242 + $0x190] sm:$0xff]
        %v306 = vld [vmem:[%s242 + $0x198] sm:$0xff]
        %v307 = vld [vmem:[%s242 + $0x1a0] sm:$0xff]
        %v308 = vld [vmem:[%s242 + $0x1a8] sm:$0xff]
        %v309 = vld [vmem:[%s242 + $0x1b0] sm:$0xff]
        %v310 = vld [vmem:[%s242 + $0x1b8] sm:$0xff]
        %v311 = vld [vmem:[%s242 + $0x1c0] sm:$0xff]
        %v312 = vld [vmem:[%s242 + $0x1c8] sm:$0xff]
        %v313 = vld [vmem:[%s242 + $0x1d0] sm:$0xff]
        %v314 = vld [vmem:[%s242 + $0x1d8] sm:$0xff]
        %v315 = vld [vmem:[%s242 + $0x1e0] sm:$0xff]
        %v316 = vld [vmem:[%s242 + $0x1e8] sm:$0xff]
        %v317 = vld [vmem:[%s242 + $0x1f0] sm:$0xff]
        %v318 = vld [vmem:[%s242 + $0x1f8] sm:$0xff]
        %v319 = vld [vmem:[%s242 + $0x200] sm:$0xff]
        %v320 = vld [vmem:[%s242 + $0x208] sm:$0xff]
        %v321 = vld [vmem:[%s242 + $0x210] sm:$0xff]
        %v322 = vld [vmem:[%s242 + $0x218] sm:$0xff]
        %v323 = vld [vmem:[%s242 + $0x220] sm:$0xff]
        %v324 = vld [vmem:[%s242 + $0x228] sm:$0xff]
        %v325 = vld [vmem:[%s242 + $0x230] sm:$0xff]
        %v326 = vld [vmem:[%s242 + $0x238] sm:$0xff]
        %v327 = vld [vmem:[%s242 + $0x240] sm:$0xff]
        %v328 = vld [vmem:[%s242 + $0x248] sm:$0xff]
        %v329 = vld [vmem:[%s242 + $0x250] sm:$0xff]
        %v330 = vld [vmem:[%s242 + $0x258] sm:$0xff]
        %v331 = vld [vmem:[%s242 + $0x260] sm:$0xff]
        %v332 = vld [vmem:[%s242 + $0x268] sm:$0xff]
        %v333 = vld [vmem:[%s242 + $0x270] sm:$0xff]
        %v334 = vld [vmem:[%s242 + $0x278] sm:$0xff]
        %v335 = vld [vmem:[%s242 + $0x280] sm:$0xff]
        %v336 = vld [vmem:[%s242 + $0x288] sm:$0xff]
        %v337 = vld [vmem:[%s242 + $0x290] sm:$0xff]
        %v338 = vld [vmem:[%s242 + $0x298] sm:$0xff]
        %v339 = vld [vmem:[%s242 + $0x2a0] sm:$0xff]
        %v340 = vld [vmem:[%s242 + $0x2a8] sm:$0xff]
        %v341 = vld [vmem:[%s242 + $0x2b0] sm:$0xff]
        %v342 = vld [vmem:[%s242 + $0x2b8] sm:$0xff]
        %v343 = vld [vmem:[%s242 + $0x2c0] sm:$0xff]
        %v344 = vld [vmem:[%s242 + $0x2c8] sm:$0xff]
        %v345 = vld [vmem:[%s242 + $0x2d0] sm:$0xff]
        %v346 = vld [vmem:[%s242 + $0x2d8] sm:$0xff]
        %v347 = vld [vmem:[%s242 + $0x2e0] sm:$0xff]
        %v348 = vld [vmem:[%s242 + $0x2e8] sm:$0xff]
        %v349 = vld [vmem:[%s242 + $0x2f0] sm:$0xff]
        %v350 = vld [vmem:[%s242 + $0x2f8] sm:$0xff]
        %v351 = vpack.c.bf16 %v261, %v255
        %v352 = vpack.c.bf16 %v262, %v256
        %v353 = vpack.c.bf16 %v263, %v257
        %v354 = vpack.c.bf16 %v264, %v258
        %v355 = vpack.c.bf16 %v265, %v259
        %v356 = vpack.c.bf16 %v266, %v260
        %v357 = vpack.c.bf16 %v273, %v267
        %v358 = vpack.c.bf16 %v274, %v268
        %v359 = vpack.c.bf16 %v275, %v269
        %v360 = vpack.c.bf16 %v276, %v270
        %v361 = vpack.c.bf16 %v277, %v271
        %v362 = vpack.c.bf16 %v278, %v272
        %v363 = vpack.c.bf16 %v285, %v279
        %v364 = vpack.c.bf16 %v286, %v280
        %v365 = vpack.c.bf16 %v287, %v281
        %v366 = vpack.c.bf16 %v288, %v282
        %v367 = vpack.c.bf16 %v289, %v283
        %v368 = vpack.c.bf16 %v290, %v284
        %v369 = vpack.c.bf16 %v297, %v291
        %v370 = vpack.c.bf16 %v298, %v292
        %v371 = vpack.c.bf16 %v299, %v293
        %v372 = vpack.c.bf16 %v300, %v294
        %v373 = vpack.c.bf16 %v301, %v295
        %v374 = vpack.c.bf16 %v302, %v296
        %v375 = vpack.c.bf16 %v309, %v303
        %v376 = vpack.c.bf16 %v310, %v304
        %v377 = vpack.c.bf16 %v311, %v305
        %v378 = vpack.c.bf16 %v312, %v306
        %v379 = vpack.c.bf16 %v313, %v307
        %v380 = vpack.c.bf16 %v314, %v308
        %v381 = vpack.c.bf16 %v321, %v315
        %v382 = vpack.c.bf16 %v322, %v316
        %v383 = vpack.c.bf16 %v323, %v317
        %v384 = vpack.c.bf16 %v324, %v318
        %v385 = vpack.c.bf16 %v325, %v319
        %v386 = vpack.c.bf16 %v326, %v320
        %v387 = vpack.c.bf16 %v333, %v327
        %v388 = vpack.c.bf16 %v334, %v328
        %v389 = vpack.c.bf16 %v335, %v329
        %v390 = vpack.c.bf16 %v336, %v330
        %v391 = vpack.c.bf16 %v337, %v331
        %v392 = vpack.c.bf16 %v338, %v332
        %v393 = vpack.c.bf16 %v345, %v339
        %v394 = vpack.c.bf16 %v346, %v340
        %v395 = vpack.c.bf16 %v347, %v341
        %v396 = vpack.c.bf16 %v348, %v342
        %v397 = vpack.c.bf16 %v349, %v343
        %v398 = vpack.c.bf16 %v350, %v344
        %v399 = vld [vmem:[%s1] sm:$0xff]
        %v400 = vld [vmem:[%s1 + $0x8] sm:$0xff]
        %v401 = vld [vmem:[%s1 + $0x10] sm:$0xff]
        %v402 = vld [vmem:[%s1 + $0x18] sm:$0xff]
        %v403 = vld [vmem:[%s1 + $0x20] sm:$0xff]
        %v404 = vld [vmem:[%s1 + $0x28] sm:$0xff]
        %v405 = vld [vmem:[%s1 + $0x30] sm:$0xff]
        %v406 = vld [vmem:[%s1 + $0x38] sm:$0xff]
        %v407 = vld [vmem:[%s1 + $0x40] sm:$0xff]
        %v408 = vld [vmem:[%s1 + $0x48] sm:$0xff]
        %v409 = vld [vmem:[%s1 + $0x50] sm:$0xff]
        %v410 = vld [vmem:[%s1 + $0x58] sm:$0xff]
        %v411 = vld [vmem:[%s1 + $0x60] sm:$0xff]
        %v412 = vld [vmem:[%s1 + $0x68] sm:$0xff]
        %v413 = vld [vmem:[%s1 + $0x70] sm:$0xff]
        %v414 = vld [vmem:[%s1 + $0x78] sm:$0xff]
        %v415 = vld [vmem:[%s1 + $0x80] sm:$0xff]
        %v416 = vld [vmem:[%s1 + $0x88] sm:$0xff]
        %v417 = vld [vmem:[%s1 + $0x90] sm:$0xff]
        %v418 = vld [vmem:[%s1 + $0x98] sm:$0xff]
        %v419 = vld [vmem:[%s1 + $0xa0] sm:$0xff]
        %v420 = vld [vmem:[%s1 + $0xa8] sm:$0xff]
        %v421 = vld [vmem:[%s1 + $0xb0] sm:$0xff]
        %v422 = vld [vmem:[%s1 + $0xb8] sm:$0xff]
        %v423 = vld [vmem:[%s1 + $0xc0] sm:$0xff]
        %v424 = vld [vmem:[%s1 + $0xc8] sm:$0xff]
        %v425 = vld [vmem:[%s1 + $0xd0] sm:$0xff]
        %v426 = vld [vmem:[%s1 + $0xd8] sm:$0xff]
        %v427 = vld [vmem:[%s1 + $0xe0] sm:$0xff]
        %v428 = vld [vmem:[%s1 + $0xe8] sm:$0xff]
        %v429 = vld [vmem:[%s1 + $0xf0] sm:$0xff]
        %v430 = vld [vmem:[%s1 + $0xf8] sm:$0xff]
        %v431 = vld [vmem:[%s1 + $0x100] sm:$0xff]
        %v432 = vld [vmem:[%s1 + $0x108] sm:$0xff]
        %v433 = vld [vmem:[%s1 + $0x110] sm:$0xff]
        %v434 = vld [vmem:[%s1 + $0x118] sm:$0xff]
        %v435 = vld [vmem:[%s1 + $0x120] sm:$0xff]
        %v436 = vld [vmem:[%s1 + $0x128] sm:$0xff]
        %v437 = vld [vmem:[%s1 + $0x130] sm:$0xff]
        %v438 = vld [vmem:[%s1 + $0x138] sm:$0xff]
        %v439 = vld [vmem:[%s1 + $0x140] sm:$0xff]
        %v440 = vld [vmem:[%s1 + $0x148] sm:$0xff]
        %v441 = vld [vmem:[%s1 + $0x150] sm:$0xff]
        %v442 = vld [vmem:[%s1 + $0x158] sm:$0xff]
        %v443 = vld [vmem:[%s1 + $0x160] sm:$0xff]
        %v444 = vld [vmem:[%s1 + $0x168] sm:$0xff]
        %v445 = vld [vmem:[%s1 + $0x170] sm:$0xff]
        %v446 = vld [vmem:[%s1 + $0x178] sm:$0xff]
        %v447 = vld [vmem:[%s1 + $0x180] sm:$0xff]
        %v448 = vld [vmem:[%s1 + $0x188] sm:$0xff]
        %v449 = vld [vmem:[%s1 + $0x190] sm:$0xff]
        %v450 = vld [vmem:[%s1 + $0x198] sm:$0xff]
        %v451 = vld [vmem:[%s1 + $0x1a0] sm:$0xff]
        %v452 = vld [vmem:[%s1 + $0x1a8] sm:$0xff]
        %v453 = vld [vmem:[%s1 + $0x1b0] sm:$0xff]
        %v454 = vld [vmem:[%s1 + $0x1b8] sm:$0xff]
        %v455 = vld [vmem:[%s1 + $0x1c0] sm:$0xff]
        %v456 = vld [vmem:[%s1 + $0x1c8] sm:$0xff]
        %v457 = vld [vmem:[%s1 + $0x1d0] sm:$0xff]
        %v458 = vld [vmem:[%s1 + $0x1d8] sm:$0xff]
        %v459 = vld [vmem:[%s1 + $0x1e0] sm:$0xff]
        %v460 = vld [vmem:[%s1 + $0x1e8] sm:$0xff]
        %v461 = vld [vmem:[%s1 + $0x1f0] sm:$0xff]
        %v462 = vld [vmem:[%s1 + $0x1f8] sm:$0xff]
        %v463 = vld [vmem:[%s1 + $0x200] sm:$0xff]
        %v464 = vld [vmem:[%s1 + $0x208] sm:$0xff]
        %v465 = vld [vmem:[%s1 + $0x210] sm:$0xff]
        %v466 = vld [vmem:[%s1 + $0x218] sm:$0xff]
        %v467 = vld [vmem:[%s1 + $0x220] sm:$0xff]
        %v468 = vld [vmem:[%s1 + $0x228] sm:$0xff]
        %v469 = vld [vmem:[%s1 + $0x230] sm:$0xff]
        %v470 = vld [vmem:[%s1 + $0x238] sm:$0xff]
        %v471 = vld [vmem:[%s1 + $0x240] sm:$0xff]
        %v472 = vld [vmem:[%s1 + $0x248] sm:$0xff]
        %v473 = vld [vmem:[%s1 + $0x250] sm:$0xff]
        %v474 = vld [vmem:[%s1 + $0x258] sm:$0xff]
        %v475 = vld [vmem:[%s1 + $0x260] sm:$0xff]
        %v476 = vld [vmem:[%s1 + $0x268] sm:$0xff]
        %v477 = vld [vmem:[%s1 + $0x270] sm:$0xff]
        %v478 = vld [vmem:[%s1 + $0x278] sm:$0xff]
        %v479 = vld [vmem:[%s1 + $0x280] sm:$0xff]
        %v480 = vld [vmem:[%s1 + $0x288] sm:$0xff]
        %v481 = vld [vmem:[%s1 + $0x290] sm:$0xff]
        %v482 = vld [vmem:[%s1 + $0x298] sm:$0xff]
        %v483 = vld [vmem:[%s1 + $0x2a0] sm:$0xff]
        %v484 = vld [vmem:[%s1 + $0x2a8] sm:$0xff]
        %v485 = vld [vmem:[%s1 + $0x2b0] sm:$0xff]
        %v486 = vld [vmem:[%s1 + $0x2b8] sm:$0xff]
        %v487 = vld [vmem:[%s1 + $0x2c0] sm:$0xff]
        %v488 = vld [vmem:[%s1 + $0x2c8] sm:$0xff]
        %v489 = vld [vmem:[%s1 + $0x2d0] sm:$0xff]
        %v490 = vld [vmem:[%s1 + $0x2d8] sm:$0xff]
        %v491 = vld [vmem:[%s1 + $0x2e0] sm:$0xff]
        %v492 = vld [vmem:[%s1 + $0x2e8] sm:$0xff]
        %v493 = vld [vmem:[%s1 + $0x2f0] sm:$0xff]
        %v494 = vld [vmem:[%s1 + $0x2f8] sm:$0xff]
        %v495 = vld [vmem:[%s2] sm:$0x3]
        %v497 = vlaneseq
        %v498 = vshrl.u32 %v497, 7
        %v499 = vsub.s32 0, %v498
        %v500 = vrot.slane %v495, %v499
        %v501 = vlaneseq
        %v502 = vshrl.u32 %v501, 7
        %v503 = vsub.s32 1, %v502
        %v504 = vrot.slane %v495, %v503
        %v603 = vunpack.c.l.b16 %v399
        %v604 = vunpack.c.h.b16 %v399
        %v605 = vunpack.c.l.b16 %v400
        %v606 = vunpack.c.h.b16 %v400
        %v607 = vunpack.c.l.b16 %v401
        %v608 = vunpack.c.h.b16 %v401
        %v609 = vunpack.c.l.b16 %v402
        %v610 = vunpack.c.h.b16 %v402
        %v611 = vunpack.c.l.b16 %v403
        %v612 = vunpack.c.h.b16 %v403
        %v613 = vunpack.c.l.b16 %v404
        %v614 = vunpack.c.h.b16 %v404
        %v615 = vunpack.c.l.b16 %v405
        %v616 = vunpack.c.h.b16 %v405
        %v617 = vunpack.c.l.b16 %v406
        %v618 = vunpack.c.h.b16 %v406
        %v619 = vunpack.c.l.b16 %v407
        %v620 = vunpack.c.h.b16 %v407
        %v621 = vunpack.c.l.b16 %v408
        %v622 = vunpack.c.h.b16 %v408
        %v623 = vunpack.c.l.b16 %v409
        %v624 = vunpack.c.h.b16 %v409
        %v625 = vunpack.c.l.b16 %v410
        %v626 = vunpack.c.h.b16 %v410
        %v627 = vunpack.c.l.b16 %v411
        %v628 = vunpack.c.h.b16 %v411
        %v629 = vunpack.c.l.b16 %v412
        %v630 = vunpack.c.h.b16 %v412
        %v631 = vunpack.c.l.b16 %v413
        %v632 = vunpack.c.h.b16 %v413
        %v633 = vunpack.c.l.b16 %v414
        %v634 = vunpack.c.h.b16 %v414
        %v635 = vunpack.c.l.b16 %v415
        %v636 = vunpack.c.h.b16 %v415
        %v637 = vunpack.c.l.b16 %v416
        %v638 = vunpack.c.h.b16 %v416
        %v639 = vunpack.c.l.b16 %v417
        %v640 = vunpack.c.h.b16 %v417
        %v641 = vunpack.c.l.b16 %v418
        %v642 = vunpack.c.h.b16 %v418
        %v643 = vunpack.c.l.b16 %v419
        %v644 = vunpack.c.h.b16 %v419
        %v645 = vunpack.c.l.b16 %v420
        %v646 = vunpack.c.h.b16 %v420
        %v647 = vunpack.c.l.b16 %v421
        %v648 = vunpack.c.h.b16 %v421
        %v649 = vunpack.c.l.b16 %v422
        %v650 = vunpack.c.h.b16 %v422
        %v651 = vunpack.c.l.b16 %v423
        %v652 = vunpack.c.h.b16 %v423
        %v653 = vunpack.c.l.b16 %v424
        %v654 = vunpack.c.h.b16 %v424
        %v655 = vunpack.c.l.b16 %v425
        %v656 = vunpack.c.h.b16 %v425
        %v657 = vunpack.c.l.b16 %v426
        %v658 = vunpack.c.h.b16 %v426
        %v659 = vunpack.c.l.b16 %v427
        %v660 = vunpack.c.h.b16 %v427
        %v661 = vunpack.c.l.b16 %v428
        %v662 = vunpack.c.h.b16 %v428
        %v663 = vunpack.c.l.b16 %v429
        %v664 = vunpack.c.h.b16 %v429
        %v665 = vunpack.c.l.b16 %v430
        %v666 = vunpack.c.h.b16 %v430
        %v667 = vunpack.c.l.b16 %v431
        %v668 = vunpack.c.h.b16 %v431
        %v669 = vunpack.c.l.b16 %v432
        %v670 = vunpack.c.h.b16 %v432
        %v671 = vunpack.c.l.b16 %v433
        %v672 = vunpack.c.h.b16 %v433
        %v673 = vunpack.c.l.b16 %v434
        %v674 = vunpack.c.h.b16 %v434
        %v675 = vunpack.c.l.b16 %v435
        %v676 = vunpack.c.h.b16 %v435
        %v677 = vunpack.c.l.b16 %v436
        %v678 = vunpack.c.h.b16 %v436
        %v679 = vunpack.c.l.b16 %v437
        %v680 = vunpack.c.h.b16 %v437
        %v681 = vunpack.c.l.b16 %v438
        %v682 = vunpack.c.h.b16 %v438
        %v683 = vunpack.c.l.b16 %v439
        %v684 = vunpack.c.h.b16 %v439
        %v685 = vunpack.c.l.b16 %v440
        %v686 = vunpack.c.h.b16 %v440
        %v687 = vunpack.c.l.b16 %v441
        %v688 = vunpack.c.h.b16 %v441
        %v689 = vunpack.c.l.b16 %v442
        %v690 = vunpack.c.h.b16 %v442
        %v691 = vunpack.c.l.b16 %v443
        %v692 = vunpack.c.h.b16 %v443
        %v693 = vunpack.c.l.b16 %v444
        %v694 = vunpack.c.h.b16 %v444
        %v695 = vunpack.c.l.b16 %v445
        %v696 = vunpack.c.h.b16 %v445
        %v697 = vunpack.c.l.b16 %v446
        %v698 = vunpack.c.h.b16 %v446
        %v699 = vunpack.c.l.b16 %v447
        %v700 = vunpack.c.h.b16 %v447
        %v701 = vunpack.c.l.b16 %v448
        %v702 = vunpack.c.h.b16 %v448
        %v703 = vunpack.c.l.b16 %v449
        %v704 = vunpack.c.h.b16 %v449
        %v705 = vunpack.c.l.b16 %v450
        %v706 = vunpack.c.h.b16 %v450
        %v707 = vunpack.c.l.b16 %v451
        %v708 = vunpack.c.h.b16 %v451
        %v709 = vunpack.c.l.b16 %v452
        %v710 = vunpack.c.h.b16 %v452
        %v711 = vunpack.c.l.b16 %v453
        %v712 = vunpack.c.h.b16 %v453
        %v713 = vunpack.c.l.b16 %v454
        %v714 = vunpack.c.h.b16 %v454
        %v715 = vunpack.c.l.b16 %v455
        %v716 = vunpack.c.h.b16 %v455
        %v717 = vunpack.c.l.b16 %v456
        %v718 = vunpack.c.h.b16 %v456
        %v719 = vunpack.c.l.b16 %v457
        %v720 = vunpack.c.h.b16 %v457
        %v721 = vunpack.c.l.b16 %v458
        %v722 = vunpack.c.h.b16 %v458
        %v723 = vunpack.c.l.b16 %v459
        %v724 = vunpack.c.h.b16 %v459
        %v725 = vunpack.c.l.b16 %v460
        %v726 = vunpack.c.h.b16 %v460
        %v727 = vunpack.c.l.b16 %v461
        %v728 = vunpack.c.h.b16 %v461
        %v729 = vunpack.c.l.b16 %v462
        %v730 = vunpack.c.h.b16 %v462
        %v731 = vunpack.c.l.b16 %v463
        %v732 = vunpack.c.h.b16 %v463
        %v733 = vunpack.c.l.b16 %v464
        %v734 = vunpack.c.h.b16 %v464
        %v735 = vunpack.c.l.b16 %v465
        %v736 = vunpack.c.h.b16 %v465
        %v737 = vunpack.c.l.b16 %v466
        %v738 = vunpack.c.h.b16 %v466
        %v739 = vunpack.c.l.b16 %v467
        %v740 = vunpack.c.h.b16 %v467
        %v741 = vunpack.c.l.b16 %v468
        %v742 = vunpack.c.h.b16 %v468
        %v743 = vunpack.c.l.b16 %v469
        %v744 = vunpack.c.h.b16 %v469
        %v745 = vunpack.c.l.b16 %v470
        %v746 = vunpack.c.h.b16 %v470
        %v747 = vunpack.c.l.b16 %v471
        %v748 = vunpack.c.h.b16 %v471
        %v749 = vunpack.c.l.b16 %v472
        %v750 = vunpack.c.h.b16 %v472
        %v751 = vunpack.c.l.b16 %v473
        %v752 = vunpack.c.h.b16 %v473
        %v753 = vunpack.c.l.b16 %v474
        %v754 = vunpack.c.h.b16 %v474
        %v755 = vunpack.c.l.b16 %v475
        %v756 = vunpack.c.h.b16 %v475
        %v757 = vunpack.c.l.b16 %v476
        %v758 = vunpack.c.h.b16 %v476
        %v759 = vunpack.c.l.b16 %v477
        %v760 = vunpack.c.h.b16 %v477
        %v761 = vunpack.c.l.b16 %v478
        %v762 = vunpack.c.h.b16 %v478
        %v763 = vunpack.c.l.b16 %v479
        %v764 = vunpack.c.h.b16 %v479
        %v765 = vunpack.c.l.b16 %v480
        %v766 = vunpack.c.h.b16 %v480
        %v767 = vunpack.c.l.b16 %v481
        %v768 = vunpack.c.h.b16 %v481
        %v769 = vunpack.c.l.b16 %v482
        %v770 = vunpack.c.h.b16 %v482
        %v771 = vunpack.c.l.b16 %v483
        %v772 = vunpack.c.h.b16 %v483
        %v773 = vunpack.c.l.b16 %v484
        %v774 = vunpack.c.h.b16 %v484
        %v775 = vunpack.c.l.b16 %v485
        %v776 = vunpack.c.h.b16 %v485
        %v777 = vunpack.c.l.b16 %v486
        %v778 = vunpack.c.h.b16 %v486
        %v779 = vunpack.c.l.b16 %v487
        %v780 = vunpack.c.h.b16 %v487
        %v781 = vunpack.c.l.b16 %v488
        %v782 = vunpack.c.h.b16 %v488
        %v783 = vunpack.c.l.b16 %v489
        %v784 = vunpack.c.h.b16 %v489
        %v785 = vunpack.c.l.b16 %v490
        %v786 = vunpack.c.h.b16 %v490
        %v787 = vunpack.c.l.b16 %v491
        %v788 = vunpack.c.h.b16 %v491
        %v789 = vunpack.c.l.b16 %v492
        %v790 = vunpack.c.h.b16 %v492
        %v791 = vunpack.c.l.b16 %v493
        %v792 = vunpack.c.h.b16 %v493
        %v793 = vunpack.c.l.b16 %v494
        %v794 = vunpack.c.h.b16 %v494
        %v795 = vpack.c.b16 %v605, %v603
        %v796 = vpack.c.b16 %v606, %v604
        %v797 = vpack.c.b16 %v609, %v607
        %v798 = vpack.c.b16 %v610, %v608
        %v799 = vpack.c.b16 %v613, %v611
        %v800 = vpack.c.b16 %v614, %v612
        %v801 = vpack.c.b16 %v617, %v615
        %v802 = vpack.c.b16 %v618, %v616
        %v803 = vpack.c.b16 %v621, %v619
        %v804 = vpack.c.b16 %v622, %v620
        %v805 = vpack.c.b16 %v625, %v623
        %v806 = vpack.c.b16 %v626, %v624
        %v807 = vpack.c.b16 %v629, %v627
        %v808 = vpack.c.b16 %v630, %v628
        %v809 = vpack.c.b16 %v633, %v631
        %v810 = vpack.c.b16 %v634, %v632
        %v811 = vpack.c.b16 %v637, %v635
        %v812 = vpack.c.b16 %v638, %v636
        %v813 = vpack.c.b16 %v641, %v639
        %v814 = vpack.c.b16 %v642, %v640
        %v815 = vpack.c.b16 %v645, %v643
        %v816 = vpack.c.b16 %v646, %v644
        %v817 = vpack.c.b16 %v649, %v647
        %v818 = vpack.c.b16 %v650, %v648
        %v819 = vpack.c.b16 %v653, %v651
        %v820 = vpack.c.b16 %v654, %v652
        %v821 = vpack.c.b16 %v657, %v655
        %v822 = vpack.c.b16 %v658, %v656
        %v823 = vpack.c.b16 %v661, %v659
        %v824 = vpack.c.b16 %v662, %v660
        %v825 = vpack.c.b16 %v665, %v663
        %v826 = vpack.c.b16 %v666, %v664
        %v827 = vpack.c.b16 %v669, %v667
        %v828 = vpack.c.b16 %v670, %v668
        %v829 = vpack.c.b16 %v673, %v671
        %v830 = vpack.c.b16 %v674, %v672
        %v831 = vpack.c.b16 %v677, %v675
        %v832 = vpack.c.b16 %v678, %v676
        %v833 = vpack.c.b16 %v681, %v679
        %v834 = vpack.c.b16 %v682, %v680
        %v835 = vpack.c.b16 %v685, %v683
        %v836 = vpack.c.b16 %v686, %v684
        %v837 = vpack.c.b16 %v689, %v687
        %v838 = vpack.c.b16 %v690, %v688
        %v839 = vpack.c.b16 %v693, %v691
        %v840 = vpack.c.b16 %v694, %v692
        %v841 = vpack.c.b16 %v697, %v695
        %v842 = vpack.c.b16 %v698, %v696
        %v843 = vpack.c.b16 %v701, %v699
        %v844 = vpack.c.b16 %v702, %v700
        %v845 = vpack.c.b16 %v705, %v703
        %v846 = vpack.c.b16 %v706, %v704
        %v847 = vpack.c.b16 %v709, %v707
        %v848 = vpack.c.b16 %v710, %v708
        %v849 = vpack.c.b16 %v713, %v711
        %v850 = vpack.c.b16 %v714, %v712
        %v851 = vpack.c.b16 %v717, %v715
        %v852 = vpack.c.b16 %v718, %v716
        %v853 = vpack.c.b16 %v721, %v719
        %v854 = vpack.c.b16 %v722, %v720
        %v855 = vpack.c.b16 %v725, %v723
        %v856 = vpack.c.b16 %v726, %v724
        %v857 = vpack.c.b16 %v729, %v727
        %v858 = vpack.c.b16 %v730, %v728
        %v859 = vpack.c.b16 %v733, %v731
        %v860 = vpack.c.b16 %v734, %v732
        %v861 = vpack.c.b16 %v737, %v735
        %v862 = vpack.c.b16 %v738, %v736
        %v863 = vpack.c.b16 %v741, %v739
        %v864 = vpack.c.b16 %v742, %v740
        %v865 = vpack.c.b16 %v745, %v743
        %v866 = vpack.c.b16 %v746, %v744
        %v867 = vpack.c.b16 %v749, %v747
        %v868 = vpack.c.b16 %v750, %v748
        %v869 = vpack.c.b16 %v753, %v751
        %v870 = vpack.c.b16 %v754, %v752
        %v871 = vpack.c.b16 %v757, %v755
        %v872 = vpack.c.b16 %v758, %v756
        %v873 = vpack.c.b16 %v761, %v759
        %v874 = vpack.c.b16 %v762, %v760
        %v875 = vpack.c.b16 %v765, %v763
        %v876 = vpack.c.b16 %v766, %v764
        %v877 = vpack.c.b16 %v769, %v767
        %v878 = vpack.c.b16 %v770, %v768
        %v879 = vpack.c.b16 %v773, %v771
        %v880 = vpack.c.b16 %v774, %v772
        %v881 = vpack.c.b16 %v777, %v775
        %v882 = vpack.c.b16 %v778, %v776
        %v883 = vpack.c.b16 %v781, %v779
        %v884 = vpack.c.b16 %v782, %v780
        %v885 = vpack.c.b16 %v785, %v783
        %v886 = vpack.c.b16 %v786, %v784
        %v887 = vpack.c.b16 %v789, %v787
        %v888 = vpack.c.b16 %v790, %v788
        %v889 = vpack.c.b16 %v793, %v791
        %v890 = vpack.c.b16 %v794, %v792
        %987 = vmatprep.subr.bf16.mxu0 %v796
        %988 = vmatpush1.bf16.msra.mxu0 %v795
        %989 = vmatprep.subr.bf16.mxu0 %v798
        %990 = vmatpush1.bf16.msra.mxu0 %v797
        %991 = vmatprep.subr.bf16.mxu0 %v800
        %992 = vmatpush1.bf16.msra.mxu0 %v799
        %993 = vmatprep.subr.bf16.mxu0 %v802
        %994 = vmatpush1.bf16.msra.mxu0 %v801
        %995 = vmatprep.subr.bf16.mxu0 %v804
        %996 = vmatpush1.bf16.msra.mxu0 %v803
        %997 = vmatprep.subr.bf16.mxu0 %v806
        %998 = vmatpush1.bf16.msra.mxu0 %v805
        %999 = vmatprep.subr.bf16.mxu0 %v808
        %1000 = vmatpush1.bf16.msra.mxu0 %v807
        %1001 = vmatprep.subr.bf16.mxu0 %v810
        %1002 = vmatpush1.bf16.msra.mxu0 %v809
        %1003 = vmatprep.subr.bf16.mxu0 %v812
        %1004 = vmatpush1.bf16.msra.mxu0 %v811
        %1005 = vmatprep.subr.bf16.mxu0 %v814
        %1006 = vmatpush1.bf16.msra.mxu0 %v813
        %1007 = vmatprep.subr.bf16.mxu0 %v816
        %1008 = vmatpush1.bf16.msra.mxu0 %v815
        %1009 = vmatprep.subr.bf16.mxu0 %v818
        %1010 = vmatpush1.bf16.msra.mxu0 %v817
        %1011 = vmatprep.subr.bf16.mxu0 %v820
        %1012 = vmatpush1.bf16.msra.mxu0 %v819
        %1013 = vmatprep.subr.bf16.mxu0 %v822
        %1014 = vmatpush1.bf16.msra.mxu0 %v821
        %1015 = vmatprep.subr.bf16.mxu0 %v824
        %1016 = vmatpush1.bf16.msra.mxu0 %v823
        %1017 = vmatprep.subr.bf16.mxu0 %v826
        %1018 = vmatpush1.bf16.msra.mxu0 %v825
        %1019 = vmatprep.mubr.bf16.mxu0 %v352
        %1020 = vmatmul.mubr.bf16.gmra.mrb[0].mxu0 %v351
        %v1021 = vpop.f32.mrb[0].mxu0
        %v1022 = vadd.f32 %v500, %v1021
        %v1023 = vpop.f32.mrb[0].mxu0
        %v1024 = vadd.f32 %v504, %v1023
        %v1025 = vpop.f32.mrb[0].mxu0
        %v1026 = vadd.f32 %v500, %v1025
        %v1027 = vpop.f32.mrb[0].mxu0
        %v1028 = vadd.f32 %v504, %v1027
        %1029 = vmatprep.mubr.bf16.mxu0 %v358
        %1030 = vmatmul.mubr.bf16.gmra.mrb[0].mxu0 %v357
        %v1031 = vpop.f32.mrb[0].mxu0
        %v1032 = vadd.f32 %v500, %v1031
        %v1033 = vpop.f32.mrb[0].mxu0
        %v1034 = vadd.f32 %v504, %v1033
        %v1035 = vpop.f32.mrb[0].mxu0
        %v1036 = vadd.f32 %v500, %v1035
        %v1037 = vpop.f32.mrb[0].mxu0
        %v1038 = vadd.f32 %v504, %v1037
        %1039 = vmatprep.mubr.bf16.mxu0 %v364
        %1040 = vmatmul.mubr.bf16.gmra.mrb[0].mxu0 %v363
        %v1041 = vpop.f32.mrb[0].mxu0
        %v1042 = vadd.f32 %v500, %v1041
        %v1043 = vpop.f32.mrb[0].mxu0
        %v1044 = vadd.f32 %v504, %v1043
        %v1045 = vpop.f32.mrb[0].mxu0
        %v1046 = vadd.f32 %v500, %v1045
        %v1047 = vpop.f32.mrb[0].mxu0
        %v1048 = vadd.f32 %v504, %v1047
        %1049 = vmatprep.mubr.bf16.mxu0 %v370
        %1050 = vmatmul.mubr.bf16.gmra.mrb[0].mxu0 %v369
        %v1051 = vpop.f32.mrb[0].mxu0
        %v1052 = vadd.f32 %v500, %v1051
        %v1053 = vpop.f32.mrb[0].mxu0
        %v1054 = vadd.f32 %v504, %v1053
        %v1055 = vpop.f32.mrb[0].mxu0
        %v1056 = vadd.f32 %v500, %v1055
        %v1057 = vpop.f32.mrb[0].mxu0
        %v1058 = vadd.f32 %v504, %v1057
        %1059 = vmatprep.mubr.bf16.mxu0 %v376
        %1060 = vmatmul.mubr.bf16.gmra.mrb[0].mxu0 %v375
        %v1061 = vpop.f32.mrb[0].mxu0
        %v1062 = vadd.f32 %v500, %v1061
        %v1063 = vpop.f32.mrb[0].mxu0
        %v1064 = vadd.f32 %v504, %v1063
        %v1065 = vpop.f32.mrb[0].mxu0
        %v1066 = vadd.f32 %v500, %v1065
        %v1067 = vpop.f32.mrb[0].mxu0
        %v1068 = vadd.f32 %v504, %v1067
        %1069 = vmatprep.mubr.bf16.mxu0 %v382
        %1070 = vmatmul.mubr.bf16.gmra.mrb[0].mxu0 %v381
        %v1071 = vpop.f32.mrb[0].mxu0
        %v1072 = vadd.f32 %v500, %v1071
        %v1073 = vpop.f32.mrb[0].mxu0
        %v1074 = vadd.f32 %v504, %v1073
        %v1075 = vpop.f32.mrb[0].mxu0
        %v1076 = vadd.f32 %v500, %v1075
        %v1077 = vpop.f32.mrb[0].mxu0
        %v1078 = vadd.f32 %v504, %v1077
        %1079 = vmatprep.mubr.bf16.mxu0 %v388
        %1080 = vmatmul.mubr.bf16.gmra.mrb[0].mxu0 %v387
        %v1081 = vpop.f32.mrb[0].mxu0
        %v1082 = vadd.f32 %v500, %v1081
        %v1083 = vpop.f32.mrb[0].mxu0
        %v1084 = vadd.f32 %v504, %v1083
        %v1085 = vpop.f32.mrb[0].mxu0
        %v1086 = vadd.f32 %v500, %v1085
        %v1087 = vpop.f32.mrb[0].mxu0
        %v1088 = vadd.f32 %v504, %v1087
        %1089 = vmatprep.mubr.bf16.mxu0 %v394
        %1090 = vmatmul.mubr.bf16.gmra.mrb[0].mxu0 %v393
        %v1091 = vpop.f32.mrb[0].mxu0
        %v1092 = vadd.f32 %v500, %v1091
        %v1093 = vpop.f32.mrb[0].mxu0
        %v1094 = vadd.f32 %v504, %v1093
        %v1095 = vpop.f32.mrb[0].mxu0
        %v1096 = vadd.f32 %v500, %v1095
        %v1097 = vpop.f32.mrb[0].mxu0
        %v1098 = vadd.f32 %v504, %v1097
        %1099 = vdwg.mxu0
        %1100 = vmatprep.subr.bf16.mxu0 %v828
        %1101 = vmatpush1.bf16.msra.mxu0 %v827
        %1102 = vmatprep.subr.bf16.mxu0 %v830
        %1103 = vmatpush1.bf16.msra.mxu0 %v829
        %1104 = vmatprep.subr.bf16.mxu0 %v832
        %1105 = vmatpush1.bf16.msra.mxu0 %v831
        %1106 = vmatprep.subr.bf16.mxu0 %v834
        %1107 = vmatpush1.bf16.msra.mxu0 %v833
        %1108 = vmatprep.subr.bf16.mxu0 %v836
        %1109 = vmatpush1.bf16.msra.mxu0 %v835
        %1110 = vmatprep.subr.bf16.mxu0 %v838
        %1111 = vmatpush1.bf16.msra.mxu0 %v837
        %1112 = vmatprep.subr.bf16.mxu0 %v840
        %1113 = vmatpush1.bf16.msra.mxu0 %v839
        %1114 = vmatprep.subr.bf16.mxu0 %v842
        %1115 = vmatpush1.bf16.msra.mxu0 %v841
        %1116 = vmatprep.subr.bf16.mxu0 %v844
        %1117 = vmatpush1.bf16.msra.mxu0 %v843
        %1118 = vmatprep.subr.bf16.mxu0 %v846
        %1119 = vmatpush1.bf16.msra.mxu0 %v845
        %1120 = vmatprep.subr.bf16.mxu0 %v848
        %1121 = vmatpush1.bf16.msra.mxu0 %v847
        %1122 = vmatprep.subr.bf16.mxu0 %v850
        %1123 = vmatpush1.bf16.msra.mxu0 %v849
        %1124 = vmatprep.subr.bf16.mxu0 %v852
        %1125 = vmatpush1.bf16.msra.mxu0 %v851
        %1126 = vmatprep.subr.bf16.mxu0 %v854
        %1127 = vmatpush1.bf16.msra.mxu0 %v853
        %1128 = vmatprep.subr.bf16.mxu0 %v856
        %1129 = vmatpush1.bf16.msra.mxu0 %v855
        %1130 = vmatprep.subr.bf16.mxu0 %v858
        %1131 = vmatpush1.bf16.msra.mxu0 %v857
        %1132 = vmatprep.mubr.bf16.mxu0 %v354
        %1133 = vmatmul.mubr.bf16.gmra.mrb[0].mxu0 %v353
        %v1134 = vpop.f32.mrb[0].mxu0
        %v1135 = vadd.f32 %v1022, %v1134
        %v1136 = vpop.f32.mrb[0].mxu0
        %v1137 = vadd.f32 %v1024, %v1136
        %v1138 = vpop.f32.mrb[0].mxu0
        %v1139 = vadd.f32 %v1026, %v1138
        %v1140 = vpop.f32.mrb[0].mxu0
        %v1141 = vadd.f32 %v1028, %v1140
        %1142 = vmatprep.mubr.bf16.mxu0 %v360
        %1143 = vmatmul.mubr.bf16.gmra.mrb[0].mxu0 %v359
        %v1144 = vpop.f32.mrb[0].mxu0
        %v1145 = vadd.f32 %v1032, %v1144
        %v1146 = vpop.f32.mrb[0].mxu0
        %v1147 = vadd.f32 %v1034, %v1146
        %v1148 = vpop.f32.mrb[0].mxu0
        %v1149 = vadd.f32 %v1036, %v1148
        %v1150 = vpop.f32.mrb[0].mxu0
        %v1151 = vadd.f32 %v1038, %v1150
        %1152 = vmatprep.mubr.bf16.mxu0 %v366
        %1153 = vmatmul.mubr.bf16.gmra.mrb[0].mxu0 %v365
        %v1154 = vpop.f32.mrb[0].mxu0
        %v1155 = vadd.f32 %v1042, %v1154
        %v1156 = vpop.f32.mrb[0].mxu0
        %v1157 = vadd.f32 %v1044, %v1156
        %v1158 = vpop.f32.mrb[0].mxu0
        %v1159 = vadd.f32 %v1046, %v1158
        %v1160 = vpop.f32.mrb[0].mxu0
        %v1161 = vadd.f32 %v1048, %v1160
        %1162 = vmatprep.mubr.bf16.mxu0 %v372
        %1163 = vmatmul.mubr.bf16.gmra.mrb[0].mxu0 %v371
        %v1164 = vpop.f32.mrb[0].mxu0
        %v1165 = vadd.f32 %v1052, %v1164
        %v1166 = vpop.f32.mrb[0].mxu0
        %v1167 = vadd.f32 %v1054, %v1166
        %v1168 = vpop.f32.mrb[0].mxu0
        %v1169 = vadd.f32 %v1056, %v1168
        %v1170 = vpop.f32.mrb[0].mxu0
        %v1171 = vadd.f32 %v1058, %v1170
        %1172 = vmatprep.mubr.bf16.mxu0 %v378
        %1173 = vmatmul.mubr.bf16.gmra.mrb[0].mxu0 %v377
        %v1174 = vpop.f32.mrb[0].mxu0
        %v1175 = vadd.f32 %v1062, %v1174
        %v1176 = vpop.f32.mrb[0].mxu0
        %v1177 = vadd.f32 %v1064, %v1176
        %v1178 = vpop.f32.mrb[0].mxu0
        %v1179 = vadd.f32 %v1066, %v1178
        %v1180 = vpop.f32.mrb[0].mxu0
        %v1181 = vadd.f32 %v1068, %v1180
        %1182 = vmatprep.mubr.bf16.mxu0 %v384
        %1183 = vmatmul.mubr.bf16.gmra.mrb[0].mxu0 %v383
        %v1184 = vpop.f32.mrb[0].mxu0
        %v1185 = vadd.f32 %v1072, %v1184
        %v1186 = vpop.f32.mrb[0].mxu0
        %v1187 = vadd.f32 %v1074, %v1186
        %v1188 = vpop.f32.mrb[0].mxu0
        %v1189 = vadd.f32 %v1076, %v1188
        %v1190 = vpop.f32.mrb[0].mxu0
        %v1191 = vadd.f32 %v1078, %v1190
        %1192 = vmatprep.mubr.bf16.mxu0 %v390
        %1193 = vmatmul.mubr.bf16.gmra.mrb[0].mxu0 %v389
        %v1194 = vpop.f32.mrb[0].mxu0
        %v1195 = vadd.f32 %v1082, %v1194
        %v1196 = vpop.f32.mrb[0].mxu0
        %v1197 = vadd.f32 %v1084, %v1196
        %v1198 = vpop.f32.mrb[0].mxu0
        %v1199 = vadd.f32 %v1086, %v1198
        %v1200 = vpop.f32.mrb[0].mxu0
        %v1201 = vadd.f32 %v1088, %v1200
        %1202 = vmatprep.mubr.bf16.mxu0 %v396
        %1203 = vmatmul.mubr.bf16.gmra.mrb[0].mxu0 %v395
        %v1204 = vpop.f32.mrb[0].mxu0
        %v1205 = vadd.f32 %v1092, %v1204
        %v1206 = vpop.f32.mrb[0].mxu0
        %v1207 = vadd.f32 %v1094, %v1206
        %v1208 = vpop.f32.mrb[0].mxu0
        %v1209 = vadd.f32 %v1096, %v1208
        %v1210 = vpop.f32.mrb[0].mxu0
        %v1211 = vadd.f32 %v1098, %v1210
        %1212 = vdwg.mxu0
        %1213 = vmatprep.subr.bf16.mxu0 %v860
        %1214 = vmatpush1.bf16.msra.mxu0 %v859
        %1215 = vmatprep.subr.bf16.mxu0 %v862
        %1216 = vmatpush1.bf16.msra.mxu0 %v861
        %1217 = vmatprep.subr.bf16.mxu0 %v864
        %1218 = vmatpush1.bf16.msra.mxu0 %v863
        %1219 = vmatprep.subr.bf16.mxu0 %v866
        %1220 = vmatpush1.bf16.msra.mxu0 %v865
        %1221 = vmatprep.subr.bf16.mxu0 %v868
        %1222 = vmatpush1.bf16.msra.mxu0 %v867
        %1223 = vmatprep.subr.bf16.mxu0 %v870
        %1224 = vmatpush1.bf16.msra.mxu0 %v869
        %1225 = vmatprep.subr.bf16.mxu0 %v872
        %1226 = vmatpush1.bf16.msra.mxu0 %v871
        %1227 = vmatprep.subr.bf16.mxu0 %v874
        %1228 = vmatpush1.bf16.msra.mxu0 %v873
        %1229 = vmatprep.subr.bf16.mxu0 %v876
        %1230 = vmatpush1.bf16.msra.mxu0 %v875
        %1231 = vmatprep.subr.bf16.mxu0 %v878
        %1232 = vmatpush1.bf16.msra.mxu0 %v877
        %1233 = vmatprep.subr.bf16.mxu0 %v880
        %1234 = vmatpush1.bf16.msra.mxu0 %v879
        %1235 = vmatprep.subr.bf16.mxu0 %v882
        %1236 = vmatpush1.bf16.msra.mxu0 %v881
        %1237 = vmatprep.subr.bf16.mxu0 %v884
        %1238 = vmatpush1.bf16.msra.mxu0 %v883
        %1239 = vmatprep.subr.bf16.mxu0 %v886
        %1240 = vmatpush1.bf16.msra.mxu0 %v885
        %1241 = vmatprep.subr.bf16.mxu0 %v888
        %1242 = vmatpush1.bf16.msra.mxu0 %v887
        %1243 = vmatprep.subr.bf16.mxu0 %v890
        %1244 = vmatpush1.bf16.msra.mxu0 %v889
        %1245 = vmatprep.mubr.bf16.mxu0 %v356
        %1246 = vmatmul.mubr.bf16.gmra.mrb[0].mxu0 %v355
        %v1247 = vpop.f32.mrb[0].mxu0
        %v1248 = vadd.f32 %v1135, %v1247
        %v1249 = vpop.f32.mrb[0].mxu0
        %v1250 = vadd.f32 %v1137, %v1249
        %v1251 = vpop.f32.mrb[0].mxu0
        %v1252 = vadd.f32 %v1139, %v1251
        %v1253 = vpop.f32.mrb[0].mxu0
        %v1254 = vadd.f32 %v1141, %v1253
        %1255 = vmatprep.mubr.bf16.mxu0 %v362
        %1256 = vmatmul.mubr.bf16.gmra.mrb[0].mxu0 %v361
        %v1257 = vpop.f32.mrb[0].mxu0
        %v1258 = vadd.f32 %v1145, %v1257
        %v1259 = vpop.f32.mrb[0].mxu0
        %v1260 = vadd.f32 %v1147, %v1259
        %v1261 = vpop.f32.mrb[0].mxu0
        %v1262 = vadd.f32 %v1149, %v1261
        %v1263 = vpop.f32.mrb[0].mxu0
        %v1264 = vadd.f32 %v1151, %v1263
        %1265 = vmatprep.mubr.bf16.mxu0 %v368
        %1266 = vmatmul.mubr.bf16.gmra.mrb[0].mxu0 %v367
        %v1267 = vpop.f32.mrb[0].mxu0
        %v1268 = vadd.f32 %v1155, %v1267
        %v1269 = vpop.f32.mrb[0].mxu0
        %v1270 = vadd.f32 %v1157, %v1269
        %v1271 = vpop.f32.mrb[0].mxu0
        %v1272 = vadd.f32 %v1159, %v1271
        %v1273 = vpop.f32.mrb[0].mxu0
        %v1274 = vadd.f32 %v1161, %v1273
        %1275 = vmatprep.mubr.bf16.mxu0 %v374
        %1276 = vmatmul.mubr.bf16.gmra.mrb[0].mxu0 %v373
        %v1277 = vpop.f32.mrb[0].mxu0
        %v1278 = vadd.f32 %v1165, %v1277
        %v1279 = vpop.f32.mrb[0].mxu0
        %v1280 = vadd.f32 %v1167, %v1279
        %v1281 = vpop.f32.mrb[0].mxu0
        %v1282 = vadd.f32 %v1169, %v1281
        %v1283 = vpop.f32.mrb[0].mxu0
        %v1284 = vadd.f32 %v1171, %v1283
        %1285 = vmatprep.mubr.bf16.mxu0 %v380
        %1286 = vmatmul.mubr.bf16.gmra.mrb[0].mxu0 %v379
        %v1287 = vpop.f32.mrb[0].mxu0
        %v1288 = vadd.f32 %v1175, %v1287
        %v1289 = vpop.f32.mrb[0].mxu0
        %v1290 = vadd.f32 %v1177, %v1289
        %v1291 = vpop.f32.mrb[0].mxu0
        %v1292 = vadd.f32 %v1179, %v1291
        %v1293 = vpop.f32.mrb[0].mxu0
        %v1294 = vadd.f32 %v1181, %v1293
        %1295 = vmatprep.mubr.bf16.mxu0 %v386
        %1296 = vmatmul.mubr.bf16.gmra.mrb[0].mxu0 %v385
        %v1297 = vpop.f32.mrb[0].mxu0
        %v1298 = vadd.f32 %v1185, %v1297
        %v1299 = vpop.f32.mrb[0].mxu0
        %v1300 = vadd.f32 %v1187, %v1299
        %v1301 = vpop.f32.mrb[0].mxu0
        %v1302 = vadd.f32 %v1189, %v1301
        %v1303 = vpop.f32.mrb[0].mxu0
        %v1304 = vadd.f32 %v1191, %v1303
        %1305 = vmatprep.mubr.bf16.mxu0 %v392
        %1306 = vmatmul.mubr.bf16.gmra.mrb[0].mxu0 %v391
        %v1307 = vpop.f32.mrb[0].mxu0
        %v1308 = vadd.f32 %v1195, %v1307
        %v1309 = vpop.f32.mrb[0].mxu0
        %v1310 = vadd.f32 %v1197, %v1309
        %v1311 = vpop.f32.mrb[0].mxu0
        %v1312 = vadd.f32 %v1199, %v1311
        %v1313 = vpop.f32.mrb[0].mxu0
        %v1314 = vadd.f32 %v1201, %v1313
        %1315 = vmatprep.mubr.bf16.mxu0 %v398
        %1316 = vmatmul.mubr.bf16.gmra.mrb[0].mxu0 %v397
        %v1317 = vpop.f32.mrb[0].mxu0
        %v1318 = vadd.f32 %v1205, %v1317
        %v1319 = vpop.f32.mrb[0].mxu0
        %v1320 = vadd.f32 %v1207, %v1319
        %v1321 = vpop.f32.mrb[0].mxu0
        %v1322 = vadd.f32 %v1209, %v1321
        %v1323 = vpop.f32.mrb[0].mxu0
        %v1324 = vadd.f32 %v1211, %v1323
        %1325 = vdwg.mxu0
        %v1326 = vmax.f32 %v1248, 0.0
        %v1327 = vmax.f32 %v1250, 0.0
        %v1328 = vmax.f32 %v1252, 0.0
        %v1329 = vmax.f32 %v1254, 0.0
        %v1330 = vmax.f32 %v1258, 0.0
        %v1331 = vmax.f32 %v1260, 0.0
        %v1332 = vmax.f32 %v1262, 0.0
        %v1333 = vmax.f32 %v1264, 0.0
        %v1334 = vmax.f32 %v1268, 0.0
        %v1335 = vmax.f32 %v1270, 0.0
        %v1336 = vmax.f32 %v1272, 0.0
        %v1337 = vmax.f32 %v1274, 0.0
        %v1338 = vmax.f32 %v1278, 0.0
        %v1339 = vmax.f32 %v1280, 0.0
        %v1340 = vmax.f32 %v1282, 0.0
        %v1341 = vmax.f32 %v1284, 0.0
        %v1342 = vmax.f32 %v1288, 0.0
        %v1343 = vmax.f32 %v1290, 0.0
        %v1344 = vmax.f32 %v1292, 0.0
        %v1345 = vmax.f32 %v1294, 0.0
        %v1346 = vmax.f32 %v1298, 0.0
        %v1347 = vmax.f32 %v1300, 0.0
        %v1348 = vmax.f32 %v1302, 0.0
        %v1349 = vmax.f32 %v1304, 0.0
        %v1350 = vmax.f32 %v1308, 0.0
        %v1351 = vmax.f32 %v1310, 0.0
        %v1352 = vmax.f32 %v1312, 0.0
        %v1353 = vmax.f32 %v1314, 0.0
        %v1354 = vmax.f32 %v1318, 0.0
        %v1355 = vmax.f32 %v1320, 0.0
        %v1356 = vmax.f32 %v1322, 0.0
        %v1357 = vmax.f32 %v1324, 0.0
        %v1358 = vpack.c.bf16 %v1328, %v1326
        %v1359 = vpack.c.bf16 %v1329, %v1327
        %v1360 = vpack.c.bf16 %v1332, %v1330
        %v1361 = vpack.c.bf16 %v1333, %v1331
        %v1362 = vpack.c.bf16 %v1336, %v1334
        %v1363 = vpack.c.bf16 %v1337, %v1335
        %v1364 = vpack.c.bf16 %v1340, %v1338
        %v1365 = vpack.c.bf16 %v1341, %v1339
        %v1366 = vpack.c.bf16 %v1344, %v1342
        %v1367 = vpack.c.bf16 %v1345, %v1343
        %v1368 = vpack.c.bf16 %v1348, %v1346
        %v1369 = vpack.c.bf16 %v1349, %v1347
        %v1370 = vpack.c.bf16 %v1352, %v1350
        %v1371 = vpack.c.bf16 %v1353, %v1351
        %v1372 = vpack.c.bf16 %v1356, %v1354
        %v1373 = vpack.c.bf16 %v1357, %v1355
        %v1374 = vld [vmem:[%s3] sm:$0xf]
        %v1375 = vld [vmem:[%s3 + $0x4] sm:$0xf]
        %v1376 = vld [vmem:[%s3 + $0x8] sm:$0xf]
        %v1377 = vld [vmem:[%s3 + $0xc] sm:$0xf]
        %v1378 = vld [vmem:[%s3 + $0x10] sm:$0xf]
        %v1379 = vld [vmem:[%s3 + $0x14] sm:$0xf]
        %v1380 = vld [vmem:[%s3 + $0x18] sm:$0xf]
        %v1381 = vld [vmem:[%s3 + $0x1c] sm:$0xf]
        %v1382 = vld [vmem:[%s3 + $0x20] sm:$0xf]
        %v1383 = vld [vmem:[%s3 + $0x24] sm:$0xf]
        %v1384 = vld [vmem:[%s3 + $0x28] sm:$0xf]
        %v1385 = vld [vmem:[%s3 + $0x2c] sm:$0xf]
        %v1386 = vld [vmem:[%s3 + $0x30] sm:$0xf]
        %v1387 = vld [vmem:[%s3 + $0x34] sm:$0xf]
        %v1388 = vld [vmem:[%s3 + $0x38] sm:$0xf]
        %v1389 = vld [vmem:[%s3 + $0x3c] sm:$0xf]
        %v1390 = vld [vmem:[%s3 + $0x40] sm:$0xf]
        %v1391 = vld [vmem:[%s3 + $0x44] sm:$0xf]
        %v1392 = vld [vmem:[%s3 + $0x48] sm:$0xf]
        %v1393 = vld [vmem:[%s3 + $0x4c] sm:$0xf]
        %v1394 = vld [vmem:[%s3 + $0x50] sm:$0xf]
        %v1395 = vld [vmem:[%s3 + $0x54] sm:$0xf]
        %v1396 = vld [vmem:[%s3 + $0x58] sm:$0xf]
        %v1397 = vld [vmem:[%s3 + $0x5c] sm:$0xf]
        %v1398 = vld [vmem:[%s3 + $0x60] sm:$0xf]
        %v1399 = vld [vmem:[%s3 + $0x64] sm:$0xf]
        %v1400 = vld [vmem:[%s3 + $0x68] sm:$0xf]
        %v1401 = vld [vmem:[%s3 + $0x6c] sm:$0xf]
        %v1402 = vld [vmem:[%s3 + $0x70] sm:$0xf]
        %v1403 = vld [vmem:[%s3 + $0x74] sm:$0xf]
        %v1404 = vld [vmem:[%s3 + $0x78] sm:$0xf]
        %v1405 = vld [vmem:[%s3 + $0x7c] sm:$0xf]
        %v1406 = vld [vmem:[%s4] sm:$0x1]
        %v1408 = vlaneseq
        %v1409 = vshrl.u32 %v1408, 7
        %v1410 = vsub.s32 0, %v1409
        %v1411 = vrot.slane %v1406, %v1410
        %v1445 = vunpack.c.l.b16 %v1374
        %v1446 = vunpack.c.l.b16 %v1375
        %v1447 = vunpack.c.l.b16 %v1376
        %v1448 = vunpack.c.l.b16 %v1377
        %v1449 = vunpack.c.l.b16 %v1378
        %v1450 = vunpack.c.l.b16 %v1379
        %v1451 = vunpack.c.l.b16 %v1380
        %v1452 = vunpack.c.l.b16 %v1381
        %v1453 = vunpack.c.l.b16 %v1382
        %v1454 = vunpack.c.l.b16 %v1383
        %v1455 = vunpack.c.l.b16 %v1384
        %v1456 = vunpack.c.l.b16 %v1385
        %v1457 = vunpack.c.l.b16 %v1386
        %v1458 = vunpack.c.l.b16 %v1387
        %v1459 = vunpack.c.l.b16 %v1388
        %v1460 = vunpack.c.l.b16 %v1389
        %v1461 = vunpack.c.l.b16 %v1390
        %v1462 = vunpack.c.l.b16 %v1391
        %v1463 = vunpack.c.l.b16 %v1392
        %v1464 = vunpack.c.l.b16 %v1393
        %v1465 = vunpack.c.l.b16 %v1394
        %v1466 = vunpack.c.l.b16 %v1395
        %v1467 = vunpack.c.l.b16 %v1396
        %v1468 = vunpack.c.l.b16 %v1397
        %v1469 = vunpack.c.l.b16 %v1398
        %v1470 = vunpack.c.l.b16 %v1399
        %v1471 = vunpack.c.l.b16 %v1400
        %v1472 = vunpack.c.l.b16 %v1401
        %v1473 = vunpack.c.l.b16 %v1402
        %v1474 = vunpack.c.l.b16 %v1403
        %v1475 = vunpack.c.l.b16 %v1404
        %v1476 = vunpack.c.l.b16 %v1405
        %v1477 = vpack.c.b16 %v1446, %v1445
        %v1478 = vpack.c.b16 %v1448, %v1447
        %v1479 = vpack.c.b16 %v1450, %v1449
        %v1480 = vpack.c.b16 %v1452, %v1451
        %v1481 = vpack.c.b16 %v1454, %v1453
        %v1482 = vpack.c.b16 %v1456, %v1455
        %v1483 = vpack.c.b16 %v1458, %v1457
        %v1484 = vpack.c.b16 %v1460, %v1459
        %v1485 = vpack.c.b16 %v1462, %v1461
        %v1486 = vpack.c.b16 %v1464, %v1463
        %v1487 = vpack.c.b16 %v1466, %v1465
        %v1488 = vpack.c.b16 %v1468, %v1467
        %v1489 = vpack.c.b16 %v1470, %v1469
        %v1490 = vpack.c.b16 %v1472, %v1471
        %v1491 = vpack.c.b16 %v1474, %v1473
        %v1492 = vpack.c.b16 %v1476, %v1475
        %1509 = vmatprep.subr.bf16.mxu0 0
        %1510 = vmatpush1.bf16.msra.mxu0 %v1477
        %1511 = vmatprep.subr.bf16.mxu0 0
        %1512 = vmatpush1.bf16.msra.mxu0 %v1478
        %1513 = vmatprep.subr.bf16.mxu0 0
        %1514 = vmatpush1.bf16.msra.mxu0 %v1479
        %1515 = vmatprep.subr.bf16.mxu0 0
        %1516 = vmatpush1.bf16.msra.mxu0 %v1480
        %1517 = vmatprep.subr.bf16.mxu0 0
        %1518 = vmatpush1.bf16.msra.mxu0 %v1481
        %1519 = vmatprep.subr.bf16.mxu0 0
        %1520 = vmatpush1.bf16.msra.mxu0 %v1482
        %1521 = vmatprep.subr.bf16.mxu0 0
        %1522 = vmatpush1.bf16.msra.mxu0 %v1483
        %1523 = vmatprep.subr.bf16.mxu0 0
        %1524 = vmatpush1.bf16.msra.mxu0 %v1484
        %1525 = vmatprep.subr.bf16.mxu0 0
        %1526 = vmatpush1.bf16.msra.mxu0 %v1485
        %1527 = vmatprep.subr.bf16.mxu0 0
        %1528 = vmatpush1.bf16.msra.mxu0 %v1486
        %1529 = vmatprep.subr.bf16.mxu0 0
        %1530 = vmatpush1.bf16.msra.mxu0 %v1487
        %1531 = vmatprep.subr.bf16.mxu0 0
        %1532 = vmatpush1.bf16.msra.mxu0 %v1488
        %1533 = vmatprep.subr.bf16.mxu0 0
        %1534 = vmatpush1.bf16.msra.mxu0 %v1489
        %1535 = vmatprep.subr.bf16.mxu0 0
        %1536 = vmatpush1.bf16.msra.mxu0 %v1490
        %1537 = vmatprep.subr.bf16.mxu0 0
        %1538 = vmatpush1.bf16.msra.mxu0 %v1491
        %1539 = vmatprep.subr.bf16.mxu0 0
        %1540 = vmatpush1.bf16.msra.mxu0 %v1492
        %1541 = vmatprep.mubr.bf16.mxu0 %v1359
        %1542 = vmatmul.mubr.bf16.gmra.mrb[0].mxu0 %v1358
        %v1543 = vpop.f32.mrb[0].mxu0
        %v1544 = vadd.f32 %v1411, %v1543
        %v1545 = vpop.f32.mrb[0].mxu0
        %v1546 = vpop.f32.mrb[0].mxu0
        %v1547 = vadd.f32 %v1411, %v1546
        %v1548 = vpop.f32.mrb[0].mxu0
        %1549 = vmatprep.mubr.bf16.mxu0 %v1361
        %1550 = vmatmul.mubr.bf16.gmra.mrb[0].mxu0 %v1360
        %v1551 = vpop.f32.mrb[0].mxu0
        %v1552 = vadd.f32 %v1411, %v1551
        %v1553 = vpop.f32.mrb[0].mxu0
        %v1554 = vpop.f32.mrb[0].mxu0
        %v1555 = vadd.f32 %v1411, %v1554
        %v1556 = vpop.f32.mrb[0].mxu0
        %1557 = vmatprep.mubr.bf16.mxu0 %v1363
        %1558 = vmatmul.mubr.bf16.gmra.mrb[0].mxu0 %v1362
        %v1559 = vpop.f32.mrb[0].mxu0
        %v1560 = vadd.f32 %v1411, %v1559
        %v1561 = vpop.f32.mrb[0].mxu0
        %v1562 = vpop.f32.mrb[0].mxu0
        %v1563 = vadd.f32 %v1411, %v1562
        %v1564 = vpop.f32.mrb[0].mxu0
        %1565 = vmatprep.mubr.bf16.mxu0 %v1365
        %1566 = vmatmul.mubr.bf16.gmra.mrb[0].mxu0 %v1364
        %v1567 = vpop.f32.mrb[0].mxu0
        %v1568 = vadd.f32 %v1411, %v1567
        %v1569 = vpop.f32.mrb[0].mxu0
        %v1570 = vpop.f32.mrb[0].mxu0
        %v1571 = vadd.f32 %v1411, %v1570
        %v1572 = vpop.f32.mrb[0].mxu0
        %1573 = vmatprep.mubr.bf16.mxu0 %v1367
        %1574 = vmatmul.mubr.bf16.gmra.mrb[0].mxu0 %v1366
        %v1575 = vpop.f32.mrb[0].mxu0
        %v1576 = vadd.f32 %v1411, %v1575
        %v1577 = vpop.f32.mrb[0].mxu0
        %v1578 = vpop.f32.mrb[0].mxu0
        %v1579 = vadd.f32 %v1411, %v1578
        %v1580 = vpop.f32.mrb[0].mxu0
        %1581 = vmatprep.mubr.bf16.mxu0 %v1369
        %1582 = vmatmul.mubr.bf16.gmra.mrb[0].mxu0 %v1368
        %v1583 = vpop.f32.mrb[0].mxu0
        %v1584 = vadd.f32 %v1411, %v1583
        %v1585 = vpop.f32.mrb[0].mxu0
        %v1586 = vpop.f32.mrb[0].mxu0
        %v1587 = vadd.f32 %v1411, %v1586
        %v1588 = vpop.f32.mrb[0].mxu0
        %1589 = vmatprep.mubr.bf16.mxu0 %v1371
        %1590 = vmatmul.mubr.bf16.gmra.mrb[0].mxu0 %v1370
        %v1591 = vpop.f32.mrb[0].mxu0
        %v1592 = vadd.f32 %v1411, %v1591
        %v1593 = vpop.f32.mrb[0].mxu0
        %v1594 = vpop.f32.mrb[0].mxu0
        %v1595 = vadd.f32 %v1411, %v1594
        %v1596 = vpop.f32.mrb[0].mxu0
        %1597 = vmatprep.mubr.bf16.mxu0 %v1373
        %1598 = vmatmul.mubr.bf16.gmra.mrb[0].mxu0 %v1372
        %v1599 = vpop.f32.mrb[0].mxu0
        %v1600 = vadd.f32 %v1411, %v1599
        %v1601 = vpop.f32.mrb[0].mxu0
        %v1602 = vpop.f32.mrb[0].mxu0
        %v1603 = vadd.f32 %v1411, %v1602
        %v1604 = vpop.f32.mrb[0].mxu0
        %1605 = vdwg.mxu0
        %1606 = vst [vmem:[%s231] sm:$0xff] %v1544
        %1607 = vst [vmem:[%s231 + $0x8] sm:$0xff] %v1547
        %1608 = vst [vmem:[%s231 + $0x10] sm:$0xff] %v1552
        %1609 = vst [vmem:[%s231 + $0x18] sm:$0xff] %v1555
        %1610 = vst [vmem:[%s231 + $0x20] sm:$0xff] %v1560
        %1611 = vst [vmem:[%s231 + $0x28] sm:$0xff] %v1563
        %1612 = vst [vmem:[%s231 + $0x30] sm:$0xff] %v1568
        %1613 = vst [vmem:[%s231 + $0x38] sm:$0xff] %v1571
        %1614 = vst [vmem:[%s231 + $0x40] sm:$0xff] %v1576
        %1615 = vst [vmem:[%s231 + $0x48] sm:$0xff] %v1579
        %1616 = vst [vmem:[%s231 + $0x50] sm:$0xff] %v1584
        %1617 = vst [vmem:[%s231 + $0x58] sm:$0xff] %v1587
        %1618 = vst [vmem:[%s231 + $0x60] sm:$0xff] %v1592
        %1619 = vst [vmem:[%s231 + $0x68] sm:$0xff] %v1595
        %1620 = vst [vmem:[%s231 + $0x70] sm:$0xff] %v1600
        %1621 = vst [vmem:[%s231 + $0x78] sm:$0xff] %v1603
        %s1622 = sand.u32 %s134, 1
        %s1623 = sand.u32 %s134, 1
        %s1624 = smul.addr %s1623, 128
        %s1625 = scalar_lea.vmem [#allocation2], %s1624
        // Predicated region
        $region41: #{wsi_classifier_forward.1} parent=39 // pred_check
          %p1626 = pneg %p144
        $region42: #{wsi_classifier_forward.1} parent=39 // pred_check_branch
          %1628 = sbr.rel (%p1626) target = $region44
        $region43: #{wsi_classifier_forward.1} parent=39 // pred_region
          %s1629 = smul.u32 16, %s16
          %s1630 = ssub.s32 25, %s1629
          %p1631 = scmp.lt.s32.totalorder %s1630, 16
          %s1632 = scalar_select %p1631, %s1630, 16
          %s1633 = smul.u32 128, %s1632
          %p1634 = scmp.ne.s32.totalorder 0, %s1633
          %s1635 = smul.addr %s1629, 8
          %s1636 = scalar_lea.vmem %s5, %s1635
          // Predicated region
          $region45: #{wsi_classifier_forward.1} parent=43 // pred_check
            %p1637 = pneg %p1634
          $region46: #{wsi_classifier_forward.1} parent=43 // pred_check_branch
            %1639 = sbr.rel (%p1637) target = $region48
          $region47: #{wsi_classifier_forward.1} parent=43 // pred_region
            // Predicated region
            $region49: #{wsi_classifier_forward.1} parent=47 // pred_check
              _
            $region50: #{wsi_classifier_forward.1} parent=47 // pred_check_branch
              %1641 = sbr.rel (0) target = $region52
            $region51: #{wsi_classifier_forward.1} parent=47 // pred_region
              // Predicated region
              $region71: #{wsi_classifier_forward.1} parent=51 // pred_check
                _
              $region72: #{wsi_classifier_forward.1} parent=51 // pred_check_branch
                %1720 = sbr.rel (0) target = $region74
              $region73: #{wsi_classifier_forward.1} parent=51 // pred_region
                %s1721 = sshrl.u32 %s1632, 4
                // While loop
                $region75: #{wsi_classifier_forward.1} parent=73 // loop_pre_header
                  _
                $region76: #{wsi_classifier_forward.1} parent=73 // loop_header
                  %s1723 = sphi 0, %s1725
                  %p1724 = scmp.ge.s32.totalorder %s1723, %s1721
                  %s1728 = sphi 0, %s1765
                  %s1729 = sphi %s1625, %s1768
                  %s1730 = sphi %s1636, %s1769
                $region77: #{wsi_classifier_forward.1} parent=73 // loop_header_branch
                  %1727 = sbr.rel (%p1724) target = $region81
                $region78: #{wsi_classifier_forward.1} parent=73 // loop_body
                  %v1731 = vld [vmem:[%s1729] sm:$0xff]
                  %1732 = vst [vmem:[%s1730] sm:$0xff] %v1731
                  %v1733 = vld [vmem:[%s1729 + $0x8] sm:$0xff]
                  %1734 = vst [vmem:[%s1730 + $0x8] sm:$0xff] %v1733
                  %v1735 = vld [vmem:[%s1729 + $0x10] sm:$0xff]
                  %1736 = vst [vmem:[%s1730 + $0x10] sm:$0xff] %v1735
                  %v1737 = vld [vmem:[%s1729 + $0x18] sm:$0xff]
                  %1738 = vst [vmem:[%s1730 + $0x18] sm:$0xff] %v1737
                  %v1739 = vld [vmem:[%s1729 + $0x20] sm:$0xff]
                  %1740 = vst [vmem:[%s1730 + $0x20] sm:$0xff] %v1739
                  %v1741 = vld [vmem:[%s1729 + $0x28] sm:$0xff]
                  %1742 = vst [vmem:[%s1730 + $0x28] sm:$0xff] %v1741
                  %v1743 = vld [vmem:[%s1729 + $0x30] sm:$0xff]
                  %1744 = vst [vmem:[%s1730 + $0x30] sm:$0xff] %v1743
                  %v1745 = vld [vmem:[%s1729 + $0x38] sm:$0xff]
                  %1746 = vst [vmem:[%s1730 + $0x38] sm:$0xff] %v1745
                  %v1747 = vld [vmem:[%s1729 + $0x40] sm:$0xff]
                  %1748 = vst [vmem:[%s1730 + $0x40] sm:$0xff] %v1747
                  %v1749 = vld [vmem:[%s1729 + $0x48] sm:$0xff]
                  %1750 = vst [vmem:[%s1730 + $0x48] sm:$0xff] %v1749
                  %v1751 = vld [vmem:[%s1729 + $0x50] sm:$0xff]
                  %1752 = vst [vmem:[%s1730 + $0x50] sm:$0xff] %v1751
                  %v1753 = vld [vmem:[%s1729 + $0x58] sm:$0xff]
                  %1754 = vst [vmem:[%s1730 + $0x58] sm:$0xff] %v1753
                  %v1755 = vld [vmem:[%s1729 + $0x60] sm:$0xff]
                  %1756 = vst [vmem:[%s1730 + $0x60] sm:$0xff] %v1755
                  %v1757 = vld [vmem:[%s1729 + $0x68] sm:$0xff]
                  %1758 = vst [vmem:[%s1730 + $0x68] sm:$0xff] %v1757
                  %v1759 = vld [vmem:[%s1729 + $0x70] sm:$0xff]
                  %1760 = vst [vmem:[%s1730 + $0x70] sm:$0xff] %v1759
                  %v1761 = vld [vmem:[%s1729 + $0x78] sm:$0xff]
                  %1762 = vst [vmem:[%s1730 + $0x78] sm:$0xff] %v1761
                  %s1763 = sadd.s32 1, %s1728
                  %p1764 = scmp.ge.s32.totalorder %s1763, %s1721
                  %s1765 = scalar_select %p1764, 0, %s1763
                  %s1766 = smul.u32 %s1765, 128
                  %s1767 = smul.u32 %s1765, 128
                  %s1768 = scalar_lea.vmem %s1625, %s1766 [#allocation2]
                  %s1769 = scalar_lea.vmem %s1636, %s1767
                $region79: #{wsi_classifier_forward.1} parent=73 // loop_footer
                  %s1725 = sadd.s32 %s1723, 1
                $region80: #{wsi_classifier_forward.1} parent=73 // loop_footer_branch
                  %1722 = sbr.rel target = $region76
                $region81: #{wsi_classifier_forward.1} parent=73 // loop_exit
                  _
                %s1770 = sshrl.u32 %s1632, 4
                %s1771 = sand.u32 %s1632, 15
                %s1772 = smul.u32 %s1770, 16
                %s1773 = smul.u32 8, %s1772
                %s1774 = scalar_lea.vmem %s1625, %s1773 [#allocation2]
                %s1775 = smul.u32 8, %s1772
                %s1776 = scalar_lea.vmem %s1636, %s1775
                // While loop
                $region82: #{wsi_classifier_forward.1} parent=73 // loop_pre_header
                  _
                $region83: #{wsi_classifier_forward.1} parent=73 // loop_header
                  %s1778 = sphi 0, %s1780
                  %p1779 = scmp.ge.s32.totalorder %s1778, %s1771
                  %s1783 = sphi 0, %s1790
                  %s1784 = sphi %s1774, %s1793
                  %s1785 = sphi %s1776, %s1794
                $region84: #{wsi_classifier_forward.1} parent=73 // loop_header_branch
                  %1782 = sbr.rel (%p1779) target = $region88
                $region85: #{wsi_classifier_forward.1} parent=73 // loop_body
                  %v1786 = vld [vmem:[%s1784] sm:$0xff]
                  %1787 = vst [vmem:[%s1785] sm:$0xff] %v1786
                  %s1788 = sadd.s32 1, %s1783
                  %p1789 = scmp.ge.s32.totalorder %s1788, %s1771
                  %s1790 = scalar_select %p1789, 0, %s1788
                  %s1791 = smul.u32 %s1790, 8
                  %s1792 = smul.u32 %s1790, 8
                  %s1793 = scalar_lea.vmem %s1774, %s1791 [#allocation2]
                  %s1794 = scalar_lea.vmem %s1776, %s1792
                $region86: #{wsi_classifier_forward.1} parent=73 // loop_footer
                  %s1780 = sadd.s32 %s1778, 1
                $region87: #{wsi_classifier_forward.1} parent=73 // loop_footer_branch
                  %1777 = sbr.rel target = $region83
                $region88: #{wsi_classifier_forward.1} parent=73 // loop_exit
                  _
              $region74: #{wsi_classifier_forward.1} parent=51 // pred_fallthru
                _
              // Predicated region
              $region89: #{wsi_classifier_forward.1} parent=51 // pred_check
                _
              $region90: #{wsi_classifier_forward.1} parent=51 // pred_check_branch
                %1796 = sbr.rel target = $region92
              $region91: #{wsi_classifier_forward.1} parent=51 // pred_region
                _
              $region92: #{wsi_classifier_forward.1} parent=51 // pred_fallthru
                _
            $region52: #{wsi_classifier_forward.1} parent=47 // pred_fallthru
              _
            // Predicated region
            $region53: #{wsi_classifier_forward.1} parent=47 // pred_check
              _
            $region54: #{wsi_classifier_forward.1} parent=47 // pred_check_branch
              %1643 = sbr.rel target = $region56
            $region55: #{wsi_classifier_forward.1} parent=47 // pred_region
              %s1645 = sshrl.u32 %s1632, 4
              // While loop
              $region57: #{wsi_classifier_forward.1} parent=55 // loop_pre_header
                _
              $region58: #{wsi_classifier_forward.1} parent=55 // loop_header
                %s1647 = sphi 0, %s1649
                %p1648 = scmp.ge.s32.totalorder %s1647, %s1645
                %s1652 = sphi 0, %s1689
                %s1653 = sphi %s1625, %s1692
                %s1654 = sphi %s1636, %s1693
              $region59: #{wsi_classifier_forward.1} parent=55 // loop_header_branch
                %1651 = sbr.rel (%p1648) target = $region63
              $region60: #{wsi_classifier_forward.1} parent=55 // loop_body
                %v1655 = vld [vmem:[%s1653] sm:$0xff]
                %1656 = vst [vmem:[%s1654] sm:$0xff] %v1655
                %v1657 = vld [vmem:[%s1653 + $0x8] sm:$0xff]
                %1658 = vst [vmem:[%s1654 + $0x8] sm:$0xff] %v1657
                %v1659 = vld [vmem:[%s1653 + $0x10] sm:$0xff]
                %1660 = vst [vmem:[%s1654 + $0x10] sm:$0xff] %v1659
                %v1661 = vld [vmem:[%s1653 + $0x18] sm:$0xff]
                %1662 = vst [vmem:[%s1654 + $0x18] sm:$0xff] %v1661
                %v1663 = vld [vmem:[%s1653 + $0x20] sm:$0xff]
                %1664 = vst [vmem:[%s1654 + $0x20] sm:$0xff] %v1663
                %v1665 = vld [vmem:[%s1653 + $0x28] sm:$0xff]
                %1666 = vst [vmem:[%s1654 + $0x28] sm:$0xff] %v1665
                %v1667 = vld [vmem:[%s1653 + $0x30] sm:$0xff]
                %1668 = vst [vmem:[%s1654 + $0x30] sm:$0xff] %v1667
                %v1669 = vld [vmem:[%s1653 + $0x38] sm:$0xff]
                %1670 = vst [vmem:[%s1654 + $0x38] sm:$0xff] %v1669
                %v1671 = vld [vmem:[%s1653 + $0x40] sm:$0xff]
                %1672 = vst [vmem:[%s1654 + $0x40] sm:$0xff] %v1671
                %v1673 = vld [vmem:[%s1653 + $0x48] sm:$0xff]
                %1674 = vst [vmem:[%s1654 + $0x48] sm:$0xff] %v1673
                %v1675 = vld [vmem:[%s1653 + $0x50] sm:$0xff]
                %1676 = vst [vmem:[%s1654 + $0x50] sm:$0xff] %v1675
                %v1677 = vld [vmem:[%s1653 + $0x58] sm:$0xff]
                %1678 = vst [vmem:[%s1654 + $0x58] sm:$0xff] %v1677
                %v1679 = vld [vmem:[%s1653 + $0x60] sm:$0xff]
                %1680 = vst [vmem:[%s1654 + $0x60] sm:$0xff] %v1679
                %v1681 = vld [vmem:[%s1653 + $0x68] sm:$0xff]
                %1682 = vst [vmem:[%s1654 + $0x68] sm:$0xff] %v1681
                %v1683 = vld [vmem:[%s1653 + $0x70] sm:$0xff]
                %1684 = vst [vmem:[%s1654 + $0x70] sm:$0xff] %v1683
                %v1685 = vld [vmem:[%s1653 + $0x78] sm:$0xff]
                %1686 = vst [vmem:[%s1654 + $0x78] sm:$0xff] %v1685
                %s1687 = sadd.s32 1, %s1652
                %p1688 = scmp.ge.s32.totalorder %s1687, %s1645
                %s1689 = scalar_select %p1688, 0, %s1687
                %s1690 = smul.u32 %s1689, 128
                %s1691 = smul.u32 %s1689, 128
                %s1692 = scalar_lea.vmem %s1625, %s1690 [#allocation2]
                %s1693 = scalar_lea.vmem %s1636, %s1691
              $region61: #{wsi_classifier_forward.1} parent=55 // loop_footer
                %s1649 = sadd.s32 %s1647, 1
              $region62: #{wsi_classifier_forward.1} parent=55 // loop_footer_branch
                %1646 = sbr.rel target = $region58
              $region63: #{wsi_classifier_forward.1} parent=55 // loop_exit
                _
              %s1694 = sshrl.u32 %s1632, 4
              %s1695 = sand.u32 %s1632, 15
              %s1696 = smul.u32 %s1694, 16
              %s1697 = smul.u32 8, %s1696
              %s1698 = scalar_lea.vmem %s1625, %s1697 [#allocation2]
              %s1699 = smul.u32 8, %s1696
              %s1700 = scalar_lea.vmem %s1636, %s1699
              // While loop
              $region64: #{wsi_classifier_forward.1} parent=55 // loop_pre_header
                _
              $region65: #{wsi_classifier_forward.1} parent=55 // loop_header
                %s1702 = sphi 0, %s1704
                %p1703 = scmp.ge.s32.totalorder %s1702, %s1695
                %s1707 = sphi 0, %s1714
                %s1708 = sphi %s1698, %s1717
                %s1709 = sphi %s1700, %s1718
              $region66: #{wsi_classifier_forward.1} parent=55 // loop_header_branch
                %1706 = sbr.rel (%p1703) target = $region70
              $region67: #{wsi_classifier_forward.1} parent=55 // loop_body
                %v1710 = vld [vmem:[%s1708] sm:$0xff]
                %1711 = vst [vmem:[%s1709] sm:$0xff] %v1710
                %s1712 = sadd.s32 1, %s1707
                %p1713 = scmp.ge.s32.totalorder %s1712, %s1695
                %s1714 = scalar_select %p1713, 0, %s1712
                %s1715 = smul.u32 %s1714, 8
                %s1716 = smul.u32 %s1714, 8
                %s1717 = scalar_lea.vmem %s1698, %s1715 [#allocation2]
                %s1718 = scalar_lea.vmem %s1700, %s1716
              $region68: #{wsi_classifier_forward.1} parent=55 // loop_footer
                %s1704 = sadd.s32 %s1702, 1
              $region69: #{wsi_classifier_forward.1} parent=55 // loop_footer_branch
                %1701 = sbr.rel target = $region65
              $region70: #{wsi_classifier_forward.1} parent=55 // loop_exit
                _
            $region56: #{wsi_classifier_forward.1} parent=47 // pred_fallthru
              _
          $region48: #{wsi_classifier_forward.1} parent=43 // pred_fallthru
            _
          %1797 = vnop
        $region44: #{wsi_classifier_forward.1} parent=39 // pred_fallthru
          _
      $region40: #{wsi_classifier_forward.1} parent=5 // pred_fallthru
        _
      %p1798 = scmp.le.s32.totalorder 2, %s11
      // Predicated region
      $region93: #{wsi_classifier_forward.1} parent=5 // pred_check
        %p1799 = pneg %p1798
      $region94: #{wsi_classifier_forward.1} parent=5 // pred_check_branch
        %1801 = sbr.rel (%p1799) target = $region96
      $region95: #{wsi_classifier_forward.1} parent=5 // pred_region
        %s1802 = ssub.s32 %s11, 2
        // Predicated region
        $region97: #{wsi_classifier_forward.1} parent=95 // pred_check
          %p1803 = pneg %p150
        $region98: #{wsi_classifier_forward.1} parent=95 // pred_check_branch
          %1805 = sbr.rel (%p1803) target = $region100
        $region99: #{wsi_classifier_forward.1} parent=95 // pred_region
          %s1806 = sand.u32 %s135, 1
          %s1807 = sand.u32 %s135, 1
          %s1808 = smul.addr %s1807, 128
          %s1809 = scalar_lea.vmem [#allocation2], %s1808
        $region100: #{wsi_classifier_forward.1} parent=95 // pred_fallthru
          _
      $region96: #{wsi_classifier_forward.1} parent=5 // pred_fallthru
        _
    $region6: #{wsi_classifier_forward.1} parent=1 // loop_footer
      %s15 = sadd.s32 1, %s11
    $region7: #{wsi_classifier_forward.1} parent=1 // loop_footer_branch
      %10 = sbr.rel target = $region3
    $region8: #{wsi_classifier_forward.1} parent=1 // loop_exit
      _

</llo_original>
